<compile_context>
chip_gen: v6e
topology: v6e:2x2x1
jax: 0.10.0
libtpu: 0.0.40
codegen_flags: <defaults>
</compile_context>

<pallas_src>
import functools

import jax
import jax.numpy as jnp
from jax.experimental import pallas as pl
from jax.experimental.pallas import tpu as pltpu


def residual_block_kernel(x_ref, w1_ref, b1_ref, w2_ref, b2_ref, o_ref, *, H, W):
    # x_ref : (1, C, H*W)   NCHW-flat input tile, lanes = H*W (dense)
    # w*_ref: (9, C, C)     per-tap weights, [tap, cout, cin], tap = (dy+1)*3+(dx+1)
    # b*_ref: (C, 1)
    # o_ref : (1, C*H*W/128, 128) lane-dense output slab (or (1, C, H*W) fallback)
    C = x_ref.shape[1]
    npix = x_ref.shape[2]

    x = x_ref[0]                                    # (C, H*W) f32, stays on-chip

    # Column-wrap validity masks, hoisted once and shared by both convs.
    col = jax.lax.broadcasted_iota(jnp.int32, (1, npix), 1) % W
    col_ok = {-1: col >= 1, 1: col <= (W - 2)}      # dx=0 needs no mask

    def conv3x3(inp, w_all, b):
        # 'same' 3x3 conv = 9 shifted K=C matmuls accumulated in f32.
        # Vertical out-of-range taps read the zero pad; horizontal wrap is masked.
        pad = jnp.zeros((C, W + 1), jnp.float32)
        xpad = jnp.concatenate([pad, inp, pad], axis=1)   # (C, npix + 2W + 2)
        acc = jnp.zeros((C, npix), jnp.float32)
        tap = 0
        for dy in (-1, 0, 1):
            for dx in (-1, 0, 1):
                start = (W + 1) + dy * W + dx             # static lane offset
                sl = xpad[:, start:start + npix]          # static tap slice -> dot
                if dx != 0:
                    sl = jnp.where(col_ok[dx], sl, 0.0)
                acc = acc + jnp.dot(w_all[tap], sl,
                                    preferred_element_type=jnp.float32)
                tap += 1
        return acc + b

    w1, w2 = w1_ref[...], w2_ref[...]
    b1, b2 = b1_ref[...], b2_ref[...]

    h = jnp.maximum(conv3x3(x, w1, b1), 0.0)              # conv1 + ReLU (on-chip)
    out = jnp.maximum(conv3x3(h, w2, b2) + x, 0.0)        # conv2 + residual + ReLU

    # Lane-dense store: (C, H*W) -> e.g. (8, 128) full unmasked vregs.
    o_ref[0] = out.reshape(o_ref.shape[1:]).astype(o_ref.dtype)


def residual_block_forward(x_nchw, w1, b1, w2, b2):
    """x_nchw: (B, C, H, W) float32. w1/w2: (3, 3, Cin, Cout) HWIO. b1/b2: (C,)."""
    B, C, H, W = x_nchw.shape
    npix = H * W

    x_flat = x_nchw.reshape(B, C, npix)                   # metadata-only reshape
    # Per-tap (cout, cin) weights: w_k[tap, co, ci] = w_hwio[dy, dx, ci, co].
    w1k = jnp.transpose(w1, (0, 1, 3, 2)).reshape(9, C, C)
    w2k = jnp.transpose(w2, (0, 1, 3, 2)).reshape(9, C, C)
    b1c, b2c = b1.reshape(C, 1), b2.reshape(C, 1)

    total = C * npix
    if total % 128 == 0:                                  # lane-dense output slab
        out_block = (1, total // 128, 128)
        out_shape = jax.ShapeDtypeStruct((B, total // 128, 128), jnp.float32)
    else:                                                 # fallback: H*W on lanes
        out_block = (1, C, npix)
        out_shape = jax.ShapeDtypeStruct((B, C, npix), jnp.float32)

    kernel = functools.partial(residual_block_kernel, H=H, W=W)
    out = pl.pallas_call(
        kernel,
        out_shape=out_shape,
        grid_spec=pltpu.PrefetchScalarGridSpec(
            num_scalar_prefetch=0,
            grid=(B,),
            in_specs=[
                pl.BlockSpec((1, C, npix), lambda b: (b, 0, 0)),   # x (flat, lane-dense)
                pl.BlockSpec((9, C, C), lambda b: (0, 0, 0)),      # conv1 tap weights
                pl.BlockSpec((C, 1), lambda b: (0, 0)),            # b1
                pl.BlockSpec((9, C, C), lambda b: (0, 0, 0)),      # conv2 tap weights
                pl.BlockSpec((C, 1), lambda b: (0, 0)),            # b2
            ],
            out_specs=pl.BlockSpec(out_block, lambda b: (b, 0, 0)),
        ),
        compiler_params=pltpu.CompilerParams(
            dimension_semantics=("parallel",),            # megacore shards batch on v7x
            vmem_limit_bytes=32 * 1024 * 1024,            # explicit budget (v7x: 64 MiB phys)
        ),
    )(x_flat, w1k, b1c, w2k, b2c)

    return out.reshape(B, C, H, W)                        # metadata-only reshape back


def _reference(x_nchw, w1, b1, w2, b2):
    """Pure-JAX reference (NCHW, matches PyTorch ResidualBlock semantics)."""
    def conv(x, w_hwio, b):
        y = jax.lax.conv_general_dilated(
            x, w_hwio, window_strides=(1, 1), padding=((1, 1), (1, 1)),
            dimension_numbers=("NCHW", "HWIO", "NCHW"))
        return y + b.reshape(1, -1, 1, 1)
    h = jax.nn.relu(conv(x_nchw, w1, b1))
    return jax.nn.relu(conv(h, w2, b2) + x_nchw)


if __name__ == "__main__":
    B, C, H, W = 2, 4, 16, 16

    key = jax.random.PRNGKey(0)
    kx, kw1, kb1, kw2, kb2 = jax.random.split(key, 5)

    x = jax.random.normal(kx, (B, C, H, W), dtype=jnp.float32)

    # Deterministic "Conv2d(channels, channels, 3, padding=1)" params, HWIO layout.
    fan_in = C * 3 * 3
    bound = 1.0 / (fan_in ** 0.5)
    w1 = jax.random.uniform(kw1, (3, 3, C, C), jnp.float32, -bound, bound)
    b1 = jax.random.uniform(kb1, (C,), jnp.float32, -bound, bound)
    w2 = jax.random.uniform(kw2, (3, 3, C, C), jnp.float32, -bound, bound)
    b2 = jax.random.uniform(kb2, (C,), jnp.float32, -bound, bound)

    out = jax.jit(residual_block_forward)(x, w1, b1, w2, b2)
    out = jax.block_until_ready(out)

    ref = _reference(x, w1, b1, w2, b2)
    assert out.shape == (B, C, H, W)
    assert jnp.allclose(out, ref, rtol=1e-3, atol=1e-3), "mismatch vs reference"

    print("KERNEL_OK")
</pallas_src>

<mosaic_0001>
module attributes {stable_mosaic.version = 11 : i64} {
  func.func @residual_block_kernel(%arg0: i32, %arg1: memref<1x4x256xf32, #tpu.memory_space<vmem>>, %arg2: memref<9x4x4xf32, #tpu.memory_space<vmem>>, %arg3: memref<4x1xf32, #tpu.memory_space<vmem>>, %arg4: memref<9x4x4xf32, #tpu.memory_space<vmem>>, %arg5: memref<4x1xf32, #tpu.memory_space<vmem>>, %arg6: memref<1x8x128xf32, #tpu.memory_space<vmem>>) attributes {dimension_semantics = [#tpu.dimension_semantics<parallel>], iteration_bounds = array<i64: 2>, scalar_prefetch = 0 : i64, scratch_operands = 0 : i64, tpu.core_type = #tpu.core_type<tc>, window_params = [{transform_indices = @transform_0, window_bounds = array<i64: 1, 4, 256>}, {pipeline_mode = #tpu.pipeline_mode<synchronous>, transform_indices = @transform_1, window_bounds = array<i64: 9, 4, 4>}, {pipeline_mode = #tpu.pipeline_mode<synchronous>, transform_indices = @transform_2, window_bounds = array<i64: 4, 1>}, {pipeline_mode = #tpu.pipeline_mode<synchronous>, transform_indices = @transform_3, window_bounds = array<i64: 9, 4, 4>}, {pipeline_mode = #tpu.pipeline_mode<synchronous>, transform_indices = @transform_4, window_bounds = array<i64: 4, 1>}, {transform_indices = @transform_5, window_bounds = array<i64: 1, 8, 128>}]} {
    %c0 = arith.constant 0 : index
    %c0_0 = arith.constant 0 : index
    %c0_1 = arith.constant 0 : index
    %0 = vector.load %arg1[%c0, %c0_0, %c0_1] : memref<1x4x256xf32, #tpu.memory_space<vmem>>, vector<1x4x256xf32>
    %1 = vector.shape_cast %0 : vector<1x4x256xf32> to vector<4x256xf32>
    %2 = tpu.iota {dimensions = array<i32: 1>} : vector<1x256xi32>
    %c16_i32 = arith.constant 16 : i32
    %c0_i32 = arith.constant 0 : i32
    %3 = arith.cmpi eq, %c16_i32, %c0_i32 : i32
    %c1_i32 = arith.constant 1 : i32
    %4 = arith.select %3, %c1_i32, %c16_i32 : i32
    %5 = vector.broadcast %4 : i32 to vector<1x256xi32>
    %6 = arith.remsi %2, %5 : vector<1x256xi32>
    %c0_i32_2 = arith.constant 0 : i32
    %7 = vector.broadcast %c0_i32_2 : i32 to vector<1x256xi32>
    %8 = arith.cmpi ne, %6, %7 : vector<1x256xi32>
    %c0_i32_3 = arith.constant 0 : i32
    %9 = vector.broadcast %c0_i32_3 : i32 to vector<1x256xi32>
    %10 = arith.cmpi slt, %6, %9 : vector<1x256xi32>
    %c0_i32_4 = arith.constant 0 : i32
    %11 = arith.cmpi slt, %4, %c0_i32_4 : i32
    %12 = vector.broadcast %11 : i1 to vector<1x256xi1>
    %13 = vector.broadcast %12 : vector<1x256xi1> to vector<1x256xi1>
    %14 = arith.xori %10, %13 : vector<1x256xi1>
    %15 = arith.andi %14, %8 : vector<1x256xi1>
    %16 = vector.broadcast %4 : i32 to vector<1x256xi32>
    %17 = arith.addi %6, %16 : vector<1x256xi32>
    %18 = arith.select %15, %17, %6 : vector<1x256xi1>, vector<1x256xi32>
    %c1_i32_5 = arith.constant 1 : i32
    %19 = vector.broadcast %c1_i32_5 : i32 to vector<1x256xi32>
    %20 = arith.cmpi sge, %18, %19 : vector<1x256xi32>
    %c14_i32 = arith.constant 14 : i32
    %21 = vector.broadcast %c14_i32 : i32 to vector<1x256xi32>
    %22 = arith.cmpi sle, %18, %21 : vector<1x256xi32>
    %c0_6 = arith.constant 0 : index
    %c0_7 = arith.constant 0 : index
    %c0_8 = arith.constant 0 : index
    %23 = vector.load %arg2[%c0_6, %c0_7, %c0_8] : memref<9x4x4xf32, #tpu.memory_space<vmem>>, vector<9x4x4xf32>
    %c0_9 = arith.constant 0 : index
    %c0_10 = arith.constant 0 : index
    %c0_11 = arith.constant 0 : index
    %24 = vector.load %arg4[%c0_9, %c0_10, %c0_11] : memref<9x4x4xf32, #tpu.memory_space<vmem>>, vector<9x4x4xf32>
    %c0_12 = arith.constant 0 : index
    %c0_13 = arith.constant 0 : index
    %25 = vector.load %arg3[%c0_12, %c0_13] : memref<4x1xf32, #tpu.memory_space<vmem>>, vector<4x1xf32>
    %c0_14 = arith.constant 0 : index
    %c0_15 = arith.constant 0 : index
    %26 = vector.load %arg5[%c0_14, %c0_15] : memref<4x1xf32, #tpu.memory_space<vmem>>, vector<4x1xf32>
    %cst = arith.constant 0.000000e+00 : f32
    %27 = vector.broadcast %cst : f32 to vector<4x17xf32>
    %28 = tpu.concatenate %27, %1, %27 in 1 : vector<4x17xf32>, vector<4x256xf32>, vector<4x17xf32> -> vector<4x290xf32>
    %cst_16 = arith.constant 0.000000e+00 : f32
    %29 = vector.broadcast %cst_16 : f32 to vector<4x256xf32>
    %30 = vector.extract_strided_slice %28 {offsets = [0, 0], sizes = [4, 256], strides = [1, 1]} : vector<4x290xf32> to vector<4x256xf32>
    %cst_17 = arith.constant 0.000000e+00 : f32
    %31 = vector.shape_cast %20 : vector<1x256xi1> to vector<1x256xi1>
    %32 = vector.broadcast %31 : vector<1x256xi1> to vector<4x256xi1>
    %33 = vector.broadcast %cst_17 : f32 to vector<4x256xf32>
    %34 = arith.select %32, %30, %33 : vector<4x256xi1>, vector<4x256xf32>
    %35 = vector.extract_strided_slice %23 {offsets = [0, 0, 0], sizes = [1, 4, 4], strides = [1, 1, 1]} : vector<9x4x4xf32> to vector<1x4x4xf32>
    %36 = vector.shape_cast %35 : vector<1x4x4xf32> to vector<4x4xf32>
    %cst_18 = arith.constant dense<0.000000e+00> : vector<4x256xf32>
    %37 = tpu.matmul %36, %34, %cst_18 {dimension_numbers = #tpu.dot_dimension_numbers<[1], [0], [0], [1], [0, 0, 1, 1], [], []>} : vector<4x4xf32>, vector<4x256xf32>, vector<4x256xf32> -> vector<4x256xf32>
    %38 = arith.addf %29, %37 : vector<4x256xf32>
    %39 = vector.extract_strided_slice %28 {offsets = [0, 1], sizes = [4, 256], strides = [1, 1]} : vector<4x290xf32> to vector<4x256xf32>
    %40 = vector.extract_strided_slice %23 {offsets = [1, 0, 0], sizes = [1, 4, 4], strides = [1, 1, 1]} : vector<9x4x4xf32> to vector<1x4x4xf32>
    %41 = vector.shape_cast %40 : vector<1x4x4xf32> to vector<4x4xf32>
    %cst_19 = arith.constant dense<0.000000e+00> : vector<4x256xf32>
    %42 = tpu.matmul %41, %39, %cst_19 {dimension_numbers = #tpu.dot_dimension_numbers<[1], [0], [0], [1], [0, 0, 1, 1], [], []>} : vector<4x4xf32>, vector<4x256xf32>, vector<4x256xf32> -> vector<4x256xf32>
    %43 = arith.addf %38, %42 : vector<4x256xf32>
    %44 = vector.extract_strided_slice %28 {offsets = [0, 2], sizes = [4, 256], strides = [1, 1]} : vector<4x290xf32> to vector<4x256xf32>
    %cst_20 = arith.constant 0.000000e+00 : f32
    %45 = vector.shape_cast %22 : vector<1x256xi1> to vector<1x256xi1>
    %46 = vector.broadcast %45 : vector<1x256xi1> to vector<4x256xi1>
    %47 = vector.broadcast %cst_20 : f32 to vector<4x256xf32>
    %48 = arith.select %46, %44, %47 : vector<4x256xi1>, vector<4x256xf32>
    %49 = vector.extract_strided_slice %23 {offsets = [2, 0, 0], sizes = [1, 4, 4], strides = [1, 1, 1]} : vector<9x4x4xf32> to vector<1x4x4xf32>
    %50 = vector.shape_cast %49 : vector<1x4x4xf32> to vector<4x4xf32>
    %cst_21 = arith.constant dense<0.000000e+00> : vector<4x256xf32>
    %51 = tpu.matmul %50, %48, %cst_21 {dimension_numbers = #tpu.dot_dimension_numbers<[1], [0], [0], [1], [0, 0, 1, 1], [], []>} : vector<4x4xf32>, vector<4x256xf32>, vector<4x256xf32> -> vector<4x256xf32>
    %52 = arith.addf %43, %51 : vector<4x256xf32>
    %53 = vector.extract_strided_slice %28 {offsets = [0, 16], sizes = [4, 256], strides = [1, 1]} : vector<4x290xf32> to vector<4x256xf32>
    %cst_22 = arith.constant 0.000000e+00 : f32
    %54 = vector.shape_cast %20 : vector<1x256xi1> to vector<1x256xi1>
    %55 = vector.broadcast %54 : vector<1x256xi1> to vector<4x256xi1>
    %56 = vector.broadcast %cst_22 : f32 to vector<4x256xf32>
    %57 = arith.select %55, %53, %56 : vector<4x256xi1>, vector<4x256xf32>
    %58 = vector.extract_strided_slice %23 {offsets = [3, 0, 0], sizes = [1, 4, 4], strides = [1, 1, 1]} : vector<9x4x4xf32> to vector<1x4x4xf32>
    %59 = vector.shape_cast %58 : vector<1x4x4xf32> to vector<4x4xf32>
    %cst_23 = arith.constant dense<0.000000e+00> : vector<4x256xf32>
    %60 = tpu.matmul %59, %57, %cst_23 {dimension_numbers = #tpu.dot_dimension_numbers<[1], [0], [0], [1], [0, 0, 1, 1], [], []>} : vector<4x4xf32>, vector<4x256xf32>, vector<4x256xf32> -> vector<4x256xf32>
    %61 = arith.addf %52, %60 : vector<4x256xf32>
    %62 = vector.extract_strided_slice %28 {offsets = [0, 17], sizes = [4, 256], strides = [1, 1]} : vector<4x290xf32> to vector<4x256xf32>
    %63 = vector.extract_strided_slice %23 {offsets = [4, 0, 0], sizes = [1, 4, 4], strides = [1, 1, 1]} : vector<9x4x4xf32> to vector<1x4x4xf32>
    %64 = vector.shape_cast %63 : vector<1x4x4xf32> to vector<4x4xf32>
    %cst_24 = arith.constant dense<0.000000e+00> : vector<4x256xf32>
    %65 = tpu.matmul %64, %62, %cst_24 {dimension_numbers = #tpu.dot_dimension_numbers<[1], [0], [0], [1], [0, 0, 1, 1], [], []>} : vector<4x4xf32>, vector<4x256xf32>, vector<4x256xf32> -> vector<4x256xf32>
    %66 = arith.addf %61, %65 : vector<4x256xf32>
    %67 = vector.extract_strided_slice %28 {offsets = [0, 18], sizes = [4, 256], strides = [1, 1]} : vector<4x290xf32> to vector<4x256xf32>
    %cst_25 = arith.constant 0.000000e+00 : f32
    %68 = vector.shape_cast %22 : vector<1x256xi1> to vector<1x256xi1>
    %69 = vector.broadcast %68 : vector<1x256xi1> to vector<4x256xi1>
    %70 = vector.broadcast %cst_25 : f32 to vector<4x256xf32>
    %71 = arith.select %69, %67, %70 : vector<4x256xi1>, vector<4x256xf32>
    %72 = vector.extract_strided_slice %23 {offsets = [5, 0, 0], sizes = [1, 4, 4], strides = [1, 1, 1]} : vector<9x4x4xf32> to vector<1x4x4xf32>
    %73 = vector.shape_cast %72 : vector<1x4x4xf32> to vector<4x4xf32>
    %cst_26 = arith.constant dense<0.000000e+00> : vector<4x256xf32>
    %74 = tpu.matmul %73, %71, %cst_26 {dimension_numbers = #tpu.dot_dimension_numbers<[1], [0], [0], [1], [0, 0, 1, 1], [], []>} : vector<4x4xf32>, vector<4x256xf32>, vector<4x256xf32> -> vector<4x256xf32>
    %75 = arith.addf %66, %74 : vector<4x256xf32>
    %76 = vector.extract_strided_slice %28 {offsets = [0, 32], sizes = [4, 256], strides = [1, 1]} : vector<4x290xf32> to vector<4x256xf32>
    %cst_27 = arith.constant 0.000000e+00 : f32
    %77 = vector.shape_cast %20 : vector<1x256xi1> to vector<1x256xi1>
    %78 = vector.broadcast %77 : vector<1x256xi1> to vector<4x256xi1>
    %79 = vector.broadcast %cst_27 : f32 to vector<4x256xf32>
    %80 = arith.select %78, %76, %79 : vector<4x256xi1>, vector<4x256xf32>
    %81 = vector.extract_strided_slice %23 {offsets = [6, 0, 0], sizes = [1, 4, 4], strides = [1, 1, 1]} : vector<9x4x4xf32> to vector<1x4x4xf32>
    %82 = vector.shape_cast %81 : vector<1x4x4xf32> to vector<4x4xf32>
    %cst_28 = arith.constant dense<0.000000e+00> : vector<4x256xf32>
    %83 = tpu.matmul %82, %80, %cst_28 {dimension_numbers = #tpu.dot_dimension_numbers<[1], [0], [0], [1], [0, 0, 1, 1], [], []>} : vector<4x4xf32>, vector<4x256xf32>, vector<4x256xf32> -> vector<4x256xf32>
    %84 = arith.addf %75, %83 : vector<4x256xf32>
    %85 = vector.extract_strided_slice %28 {offsets = [0, 33], sizes = [4, 256], strides = [1, 1]} : vector<4x290xf32> to vector<4x256xf32>
    %86 = vector.extract_strided_slice %23 {offsets = [7, 0, 0], sizes = [1, 4, 4], strides = [1, 1, 1]} : vector<9x4x4xf32> to vector<1x4x4xf32>
    %87 = vector.shape_cast %86 : vector<1x4x4xf32> to vector<4x4xf32>
    %cst_29 = arith.constant dense<0.000000e+00> : vector<4x256xf32>
    %88 = tpu.matmul %87, %85, %cst_29 {dimension_numbers = #tpu.dot_dimension_numbers<[1], [0], [0], [1], [0, 0, 1, 1], [], []>} : vector<4x4xf32>, vector<4x256xf32>, vector<4x256xf32> -> vector<4x256xf32>
    %89 = arith.addf %84, %88 : vector<4x256xf32>
    %90 = vector.extract_strided_slice %28 {offsets = [0, 34], sizes = [4, 256], strides = [1, 1]} : vector<4x290xf32> to vector<4x256xf32>
    %cst_30 = arith.constant 0.000000e+00 : f32
    %91 = vector.shape_cast %22 : vector<1x256xi1> to vector<1x256xi1>
    %92 = vector.broadcast %91 : vector<1x256xi1> to vector<4x256xi1>
    %93 = vector.broadcast %cst_30 : f32 to vector<4x256xf32>
    %94 = arith.select %92, %90, %93 : vector<4x256xi1>, vector<4x256xf32>
    %95 = vector.extract_strided_slice %23 {offsets = [8, 0, 0], sizes = [1, 4, 4], strides = [1, 1, 1]} : vector<9x4x4xf32> to vector<1x4x4xf32>
    %96 = vector.shape_cast %95 : vector<1x4x4xf32> to vector<4x4xf32>
    %cst_31 = arith.constant dense<0.000000e+00> : vector<4x256xf32>
    %97 = tpu.matmul %96, %94, %cst_31 {dimension_numbers = #tpu.dot_dimension_numbers<[1], [0], [0], [1], [0, 0, 1, 1], [], []>} : vector<4x4xf32>, vector<4x256xf32>, vector<4x256xf32> -> vector<4x256xf32>
    %98 = arith.addf %89, %97 : vector<4x256xf32>
    %99 = vector.broadcast %25 : vector<4x1xf32> to vector<4x256xf32>
    %100 = arith.addf %98, %99 : vector<4x256xf32>
    %cst_32 = arith.constant 0.000000e+00 : f32
    %101 = vector.broadcast %cst_32 : f32 to vector<4x256xf32>
    %102 = arith.maximumf %100, %101 : vector<4x256xf32>
    %cst_33 = arith.constant 0.000000e+00 : f32
    %103 = vector.broadcast %cst_33 : f32 to vector<4x17xf32>
    %104 = tpu.concatenate %103, %102, %103 in 1 : vector<4x17xf32>, vector<4x256xf32>, vector<4x17xf32> -> vector<4x290xf32>
    %cst_34 = arith.constant 0.000000e+00 : f32
    %105 = vector.broadcast %cst_34 : f32 to vector<4x256xf32>
    %106 = vector.extract_strided_slice %104 {offsets = [0, 0], sizes = [4, 256], strides = [1, 1]} : vector<4x290xf32> to vector<4x256xf32>
    %cst_35 = arith.constant 0.000000e+00 : f32
    %107 = vector.shape_cast %20 : vector<1x256xi1> to vector<1x256xi1>
    %108 = vector.broadcast %107 : vector<1x256xi1> to vector<4x256xi1>
    %109 = vector.broadcast %cst_35 : f32 to vector<4x256xf32>
    %110 = arith.select %108, %106, %109 : vector<4x256xi1>, vector<4x256xf32>
    %111 = vector.extract_strided_slice %24 {offsets = [0, 0, 0], sizes = [1, 4, 4], strides = [1, 1, 1]} : vector<9x4x4xf32> to vector<1x4x4xf32>
    %112 = vector.shape_cast %111 : vector<1x4x4xf32> to vector<4x4xf32>
    %cst_36 = arith.constant dense<0.000000e+00> : vector<4x256xf32>
    %113 = tpu.matmul %112, %110, %cst_36 {dimension_numbers = #tpu.dot_dimension_numbers<[1], [0], [0], [1], [0, 0, 1, 1], [], []>} : vector<4x4xf32>, vector<4x256xf32>, vector<4x256xf32> -> vector<4x256xf32>
    %114 = arith.addf %105, %113 : vector<4x256xf32>
    %115 = vector.extract_strided_slice %104 {offsets = [0, 1], sizes = [4, 256], strides = [1, 1]} : vector<4x290xf32> to vector<4x256xf32>
    %116 = vector.extract_strided_slice %24 {offsets = [1, 0, 0], sizes = [1, 4, 4], strides = [1, 1, 1]} : vector<9x4x4xf32> to vector<1x4x4xf32>
    %117 = vector.shape_cast %116 : vector<1x4x4xf32> to vector<4x4xf32>
    %cst_37 = arith.constant dense<0.000000e+00> : vector<4x256xf32>
    %118 = tpu.matmul %117, %115, %cst_37 {dimension_numbers = #tpu.dot_dimension_numbers<[1], [0], [0], [1], [0, 0, 1, 1], [], []>} : vector<4x4xf32>, vector<4x256xf32>, vector<4x256xf32> -> vector<4x256xf32>
    %119 = arith.addf %114, %118 : vector<4x256xf32>
    %120 = vector.extract_strided_slice %104 {offsets = [0, 2], sizes = [4, 256], strides = [1, 1]} : vector<4x290xf32> to vector<4x256xf32>
    %cst_38 = arith.constant 0.000000e+00 : f32
    %121 = vector.shape_cast %22 : vector<1x256xi1> to vector<1x256xi1>
    %122 = vector.broadcast %121 : vector<1x256xi1> to vector<4x256xi1>
    %123 = vector.broadcast %cst_38 : f32 to vector<4x256xf32>
    %124 = arith.select %122, %120, %123 : vector<4x256xi1>, vector<4x256xf32>
    %125 = vector.extract_strided_slice %24 {offsets = [2, 0, 0], sizes = [1, 4, 4], strides = [1, 1, 1]} : vector<9x4x4xf32> to vector<1x4x4xf32>
    %126 = vector.shape_cast %125 : vector<1x4x4xf32> to vector<4x4xf32>
    %cst_39 = arith.constant dense<0.000000e+00> : vector<4x256xf32>
    %127 = tpu.matmul %126, %124, %cst_39 {dimension_numbers = #tpu.dot_dimension_numbers<[1], [0], [0], [1], [0, 0, 1, 1], [], []>} : vector<4x4xf32>, vector<4x256xf32>, vector<4x256xf32> -> vector<4x256xf32>
    %128 = arith.addf %119, %127 : vector<4x256xf32>
    %129 = vector.extract_strided_slice %104 {offsets = [0, 16], sizes = [4, 256], strides = [1, 1]} : vector<4x290xf32> to vector<4x256xf32>
    %cst_40 = arith.constant 0.000000e+00 : f32
    %130 = vector.shape_cast %20 : vector<1x256xi1> to vector<1x256xi1>
    %131 = vector.broadcast %130 : vector<1x256xi1> to vector<4x256xi1>
    %132 = vector.broadcast %cst_40 : f32 to vector<4x256xf32>
    %133 = arith.select %131, %129, %132 : vector<4x256xi1>, vector<4x256xf32>
    %134 = vector.extract_strided_slice %24 {offsets = [3, 0, 0], sizes = [1, 4, 4], strides = [1, 1, 1]} : vector<9x4x4xf32> to vector<1x4x4xf32>
    %135 = vector.shape_cast %134 : vector<1x4x4xf32> to vector<4x4xf32>
    %cst_41 = arith.constant dense<0.000000e+00> : vector<4x256xf32>
    %136 = tpu.matmul %135, %133, %cst_41 {dimension_numbers = #tpu.dot_dimension_numbers<[1], [0], [0], [1], [0, 0, 1, 1], [], []>} : vector<4x4xf32>, vector<4x256xf32>, vector<4x256xf32> -> vector<4x256xf32>
    %137 = arith.addf %128, %136 : vector<4x256xf32>
    %138 = vector.extract_strided_slice %104 {offsets = [0, 17], sizes = [4, 256], strides = [1, 1]} : vector<4x290xf32> to vector<4x256xf32>
    %139 = vector.extract_strided_slice %24 {offsets = [4, 0, 0], sizes = [1, 4, 4], strides = [1, 1, 1]} : vector<9x4x4xf32> to vector<1x4x4xf32>
    %140 = vector.shape_cast %139 : vector<1x4x4xf32> to vector<4x4xf32>
    %cst_42 = arith.constant dense<0.000000e+00> : vector<4x256xf32>
    %141 = tpu.matmul %140, %138, %cst_42 {dimension_numbers = #tpu.dot_dimension_numbers<[1], [0], [0], [1], [0, 0, 1, 1], [], []>} : vector<4x4xf32>, vector<4x256xf32>, vector<4x256xf32> -> vector<4x256xf32>
    %142 = arith.addf %137, %141 : vector<4x256xf32>
    %143 = vector.extract_strided_slice %104 {offsets = [0, 18], sizes = [4, 256], strides = [1, 1]} : vector<4x290xf32> to vector<4x256xf32>
    %cst_43 = arith.constant 0.000000e+00 : f32
    %144 = vector.shape_cast %22 : vector<1x256xi1> to vector<1x256xi1>
    %145 = vector.broadcast %144 : vector<1x256xi1> to vector<4x256xi1>
    %146 = vector.broadcast %cst_43 : f32 to vector<4x256xf32>
    %147 = arith.select %145, %143, %146 : vector<4x256xi1>, vector<4x256xf32>
    %148 = vector.extract_strided_slice %24 {offsets = [5, 0, 0], sizes = [1, 4, 4], strides = [1, 1, 1]} : vector<9x4x4xf32> to vector<1x4x4xf32>
    %149 = vector.shape_cast %148 : vector<1x4x4xf32> to vector<4x4xf32>
    %cst_44 = arith.constant dense<0.000000e+00> : vector<4x256xf32>
    %150 = tpu.matmul %149, %147, %cst_44 {dimension_numbers = #tpu.dot_dimension_numbers<[1], [0], [0], [1], [0, 0, 1, 1], [], []>} : vector<4x4xf32>, vector<4x256xf32>, vector<4x256xf32> -> vector<4x256xf32>
    %151 = arith.addf %142, %150 : vector<4x256xf32>
    %152 = vector.extract_strided_slice %104 {offsets = [0, 32], sizes = [4, 256], strides = [1, 1]} : vector<4x290xf32> to vector<4x256xf32>
    %cst_45 = arith.constant 0.000000e+00 : f32
    %153 = vector.shape_cast %20 : vector<1x256xi1> to vector<1x256xi1>
    %154 = vector.broadcast %153 : vector<1x256xi1> to vector<4x256xi1>
    %155 = vector.broadcast %cst_45 : f32 to vector<4x256xf32>
    %156 = arith.select %154, %152, %155 : vector<4x256xi1>, vector<4x256xf32>
    %157 = vector.extract_strided_slice %24 {offsets = [6, 0, 0], sizes = [1, 4, 4], strides = [1, 1, 1]} : vector<9x4x4xf32> to vector<1x4x4xf32>
    %158 = vector.shape_cast %157 : vector<1x4x4xf32> to vector<4x4xf32>
    %cst_46 = arith.constant dense<0.000000e+00> : vector<4x256xf32>
    %159 = tpu.matmul %158, %156, %cst_46 {dimension_numbers = #tpu.dot_dimension_numbers<[1], [0], [0], [1], [0, 0, 1, 1], [], []>} : vector<4x4xf32>, vector<4x256xf32>, vector<4x256xf32> -> vector<4x256xf32>
    %160 = arith.addf %151, %159 : vector<4x256xf32>
    %161 = vector.extract_strided_slice %104 {offsets = [0, 33], sizes = [4, 256], strides = [1, 1]} : vector<4x290xf32> to vector<4x256xf32>
    %162 = vector.extract_strided_slice %24 {offsets = [7, 0, 0], sizes = [1, 4, 4], strides = [1, 1, 1]} : vector<9x4x4xf32> to vector<1x4x4xf32>
    %163 = vector.shape_cast %162 : vector<1x4x4xf32> to vector<4x4xf32>
    %cst_47 = arith.constant dense<0.000000e+00> : vector<4x256xf32>
    %164 = tpu.matmul %163, %161, %cst_47 {dimension_numbers = #tpu.dot_dimension_numbers<[1], [0], [0], [1], [0, 0, 1, 1], [], []>} : vector<4x4xf32>, vector<4x256xf32>, vector<4x256xf32> -> vector<4x256xf32>
    %165 = arith.addf %160, %164 : vector<4x256xf32>
    %166 = vector.extract_strided_slice %104 {offsets = [0, 34], sizes = [4, 256], strides = [1, 1]} : vector<4x290xf32> to vector<4x256xf32>
    %cst_48 = arith.constant 0.000000e+00 : f32
    %167 = vector.shape_cast %22 : vector<1x256xi1> to vector<1x256xi1>
    %168 = vector.broadcast %167 : vector<1x256xi1> to vector<4x256xi1>
    %169 = vector.broadcast %cst_48 : f32 to vector<4x256xf32>
    %170 = arith.select %168, %166, %169 : vector<4x256xi1>, vector<4x256xf32>
    %171 = vector.extract_strided_slice %24 {offsets = [8, 0, 0], sizes = [1, 4, 4], strides = [1, 1, 1]} : vector<9x4x4xf32> to vector<1x4x4xf32>
    %172 = vector.shape_cast %171 : vector<1x4x4xf32> to vector<4x4xf32>
    %cst_49 = arith.constant dense<0.000000e+00> : vector<4x256xf32>
    %173 = tpu.matmul %172, %170, %cst_49 {dimension_numbers = #tpu.dot_dimension_numbers<[1], [0], [0], [1], [0, 0, 1, 1], [], []>} : vector<4x4xf32>, vector<4x256xf32>, vector<4x256xf32> -> vector<4x256xf32>
    %174 = arith.addf %165, %173 : vector<4x256xf32>
    %175 = vector.broadcast %26 : vector<4x1xf32> to vector<4x256xf32>
    %176 = arith.addf %174, %175 : vector<4x256xf32>
    %177 = arith.addf %176, %1 : vector<4x256xf32>
    %cst_50 = arith.constant 0.000000e+00 : f32
    %178 = vector.broadcast %cst_50 : f32 to vector<4x256xf32>
    %179 = arith.maximumf %177, %178 : vector<4x256xf32>
    %180 = vector.shape_cast %179 : vector<4x256xf32> to vector<8x128xf32>
    %c0_51 = arith.constant 0 : index
    %c0_52 = arith.constant 0 : index
    %c0_53 = arith.constant 0 : index
    %181 = vector.load %arg6[%c0_51, %c0_52, %c0_53] : memref<1x8x128xf32, #tpu.memory_space<vmem>>, vector<1x8x128xf32>
    %182 = vector.shape_cast %181 : vector<1x8x128xf32> to vector<8x128xf32>
    %183 = vector.shape_cast %180 : vector<8x128xf32> to vector<1x8x128xf32>
    tpu.vector_store %arg6[%c0_51, %c0_52, %c0_53], %183 {strides = array<i32>} : memref<1x8x128xf32, #tpu.memory_space<vmem>>, vector<1x8x128xf32>,
    return
  }
  func.func @transform_0(%arg0: i32) -> (i32, i32, i32) {
    %c0_i32 = arith.constant 0 : i32
    %c0_i32_0 = arith.constant 0 : i32
    %c0_i32_1 = arith.constant 0 : i32
    return %arg0, %c0_i32, %c0_i32_0 : i32, i32, i32
  }
  func.func @transform_1(%arg0: i32) -> (i32, i32, i32) {
    %c0_i32 = arith.constant 0 : i32
    %c0_i32_0 = arith.constant 0 : i32
    %c0_i32_1 = arith.constant 0 : i32
    %c0_i32_2 = arith.constant 0 : i32
    return %c0_i32, %c0_i32_0, %c0_i32_1 : i32, i32, i32
  }
  func.func @transform_2(%arg0: i32) -> (i32, i32) {
    %c0_i32 = arith.constant 0 : i32
    %c0_i32_0 = arith.constant 0 : i32
    %c0_i32_1 = arith.constant 0 : i32
    return %c0_i32, %c0_i32_0 : i32, i32
  }
  func.func @transform_3(%arg0: i32) -> (i32, i32, i32) {
    %c0_i32 = arith.constant 0 : i32
    %c0_i32_0 = arith.constant 0 : i32
    %c0_i32_1 = arith.constant 0 : i32
    %c0_i32_2 = arith.constant 0 : i32
    return %c0_i32, %c0_i32_0, %c0_i32_1 : i32, i32, i32
  }
  func.func @transform_4(%arg0: i32) -> (i32, i32) {
    %c0_i32 = arith.constant 0 : i32
    %c0_i32_0 = arith.constant 0 : i32
    %c0_i32_1 = arith.constant 0 : i32
    return %c0_i32, %c0_i32_0 : i32, i32
  }
  func.func @transform_5(%arg0: i32) -> (i32, i32, i32) {
    %c0_i32 = arith.constant 0 : i32
    %c0_i32_0 = arith.constant 0 : i32
    %c0_i32_1 = arith.constant 0 : i32
    return %arg0, %c0_i32, %c0_i32_0 : i32, i32, i32
  }
}

</mosaic_0001>

<llo_original>
// kernel: residual_block_forward.1
$region0: #{residual_block_forward.1}
  #allocation0 [shape = 'u32[]', space=smem, size = 0x4, offset = 0x4, fixed_abs, tag = 'smem constant byte address 0x4 - core index']
  #allocation1 [shape = 'u32[144,128]{1,0:T(1,128)}', space=vmem, size = 0x12000, scoped, tag = 'internal scratch']
  %s0 = inlined_call_operand.vmem [shape: f32[2,4,256], index: 0, kind: input, shape index: {}]
  %s1 = inlined_call_operand.vmem [shape: f32[9,4,4], index: 1, kind: input, shape index: {}]
  %s2 = inlined_call_operand.vmem [shape: f32[4,1], index: 2, kind: input, shape index: {}]
  %s3 = inlined_call_operand.vmem [shape: f32[9,4,4], index: 3, kind: input, shape index: {}]
  %s4 = inlined_call_operand.vmem [shape: f32[4,1], index: 4, kind: input, shape index: {}]
  %s5 = inlined_call_operand.vmem [shape: f32[2,8,128], index: 5, kind: output, shape index: {}]
  %s6 = sld [smem:[#allocation0]]
  $region53: #{residual_block_forward.1} parent=0
    _
  %s8 = ssub.s32 1, %s6
  %s9 = scalar_select 0, %s8, %s6
  loop: start=0, step=1, limit=4
  $region2: #{residual_block_forward.1} parent=0 // loop_pre_header
    _
  $region3: #{residual_block_forward.1} parent=0 // loop_header
    %s11 = sphi 0, %s15
    %p12 = scmp.ge.s32.totalorder %s11, 4
    %s21 = sphi 0, %s23
    %s24 = sphi 0, %s21
    %s25 = sphi 0, %s24
    %s41 = sphi 0, %s25
    %s45 = sphi 0, %s45
    %s47 = sphi 0, %s45
    %s48 = sphi 0, %s47
    %s62 = sphi 0, %s48
    %s66 = sphi 0, %s66
    %s68 = sphi 0, %s66
    %s69 = sphi 0, %s68
    %s83 = sphi 0, %s69
    %s87 = sphi 0, %s87
    %s89 = sphi 0, %s87
    %s90 = sphi 0, %s89
    %s104 = sphi 0, %s90
    %s108 = sphi 0, %s108
    %s110 = sphi 0, %s108
    %s111 = sphi 0, %s110
    %s125 = sphi 0, %s111
    %s131 = sphi 0, %s133
    %s134 = sphi 0, %s131
    %s135 = sphi 0, %s134
    %s151 = sphi 0, %s135
  $region4: #{residual_block_forward.1} parent=0 // loop_header_branch
    %14 = sbr.rel (%p12) target = $region8
  $region5: #{residual_block_forward.1} parent=0 // loop_body
    %s16 = ssub.s32 %s11, 1
    %s17 = ssub.s32 %s11, 2
    %s18 = sadd.s32 %s11, 1
    %s19 = ssub.s32 %s11, %s18
    %p20 = scmp.eq.s32.totalorder %s19, 0
    %s22 = sadd.s32 %s21, 1
    %s23 = scalar_select %p20, %s21, %s22
    %p26 = pneg %p20
    %p27 = scmp.eq.s32.totalorder %s11, 1
    %p28 = por %p26, %p27
    %p29 = scmp.ne.s32.totalorder %s21, %s24
    %p30 = scmp.eq.s32.totalorder %s11, 0
    %p31 = por %p29, %p30
    %p32 = scmp.ne.s32.totalorder %s21, %s24
    %p33 = scmp.eq.s32.totalorder %s16, 1
    %p34 = por %p32, %p33
    %p35 = scmp.ne.s32.totalorder %s24, %s25
    %p36 = scmp.eq.s32.totalorder %s16, 0
    %p37 = por %p35, %p36
    %p38 = scmp.ne.s32.totalorder %s24, %s25
    %p39 = scmp.eq.s32.totalorder %s17, 1
    %p40 = por %p38, %p39
    %p42 = scmp.ne.s32.totalorder %s25, %s41
    %p43 = scmp.eq.s32.totalorder %s17, 0
    %p44 = por %p42, %p43
    %s46 = sadd.s32 %s45, 1
    %p49 = scmp.eq.s32.totalorder %s11, 1
    %p50 = scmp.ne.s32.totalorder %s45, %s47
    %p51 = scmp.eq.s32.totalorder %s11, 0
    %p52 = por %p50, %p51
    %p53 = scmp.ne.s32.totalorder %s45, %s47
    %p54 = scmp.eq.s32.totalorder %s16, 1
    %p55 = por %p53, %p54
    %p56 = scmp.ne.s32.totalorder %s47, %s48
    %p57 = scmp.eq.s32.totalorder %s16, 0
    %p58 = por %p56, %p57
    %p59 = scmp.ne.s32.totalorder %s47, %s48
    %p60 = scmp.eq.s32.totalorder %s17, 1
    %p61 = por %p59, %p60
    %p63 = scmp.ne.s32.totalorder %s48, %s62
    %p64 = scmp.eq.s32.totalorder %s17, 0
    %p65 = por %p63, %p64
    %s67 = sadd.s32 %s66, 1
    %p70 = scmp.eq.s32.totalorder %s11, 1
    %p71 = scmp.ne.s32.totalorder %s66, %s68
    %p72 = scmp.eq.s32.totalorder %s11, 0
    %p73 = por %p71, %p72
    %p74 = scmp.ne.s32.totalorder %s66, %s68
    %p75 = scmp.eq.s32.totalorder %s16, 1
    %p76 = por %p74, %p75
    %p77 = scmp.ne.s32.totalorder %s68, %s69
    %p78 = scmp.eq.s32.totalorder %s16, 0
    %p79 = por %p77, %p78
    %p80 = scmp.ne.s32.totalorder %s68, %s69
    %p81 = scmp.eq.s32.totalorder %s17, 1
    %p82 = por %p80, %p81
    %p84 = scmp.ne.s32.totalorder %s69, %s83
    %p85 = scmp.eq.s32.totalorder %s17, 0
    %p86 = por %p84, %p85
    %s88 = sadd.s32 %s87, 1
    %p91 = scmp.eq.s32.totalorder %s11, 1
    %p92 = scmp.ne.s32.totalorder %s87, %s89
    %p93 = scmp.eq.s32.totalorder %s11, 0
    %p94 = por %p92, %p93
    %p95 = scmp.ne.s32.totalorder %s87, %s89
    %p96 = scmp.eq.s32.totalorder %s16, 1
    %p97 = por %p95, %p96
    %p98 = scmp.ne.s32.totalorder %s89, %s90
    %p99 = scmp.eq.s32.totalorder %s16, 0
    %p100 = por %p98, %p99
    %p101 = scmp.ne.s32.totalorder %s89, %s90
    %p102 = scmp.eq.s32.totalorder %s17, 1
    %p103 = por %p101, %p102
    %p105 = scmp.ne.s32.totalorder %s90, %s104
    %p106 = scmp.eq.s32.totalorder %s17, 0
    %p107 = por %p105, %p106
    %s109 = sadd.s32 %s108, 1
    %p112 = scmp.eq.s32.totalorder %s11, 1
    %p113 = scmp.ne.s32.totalorder %s108, %s110
    %p114 = scmp.eq.s32.totalorder %s11, 0
    %p115 = por %p113, %p114
    %p116 = scmp.ne.s32.totalorder %s108, %s110
    %p117 = scmp.eq.s32.totalorder %s16, 1
    %p118 = por %p116, %p117
    %p119 = scmp.ne.s32.totalorder %s110, %s111
    %p120 = scmp.eq.s32.totalorder %s16, 0
    %p121 = por %p119, %p120
    %p122 = scmp.ne.s32.totalorder %s110, %s111
    %p123 = scmp.eq.s32.totalorder %s17, 1
    %p124 = por %p122, %p123
    %p126 = scmp.ne.s32.totalorder %s111, %s125
    %p127 = scmp.eq.s32.totalorder %s17, 0
    %p128 = por %p126, %p127
    %s129 = ssub.s32 %s11, %s18
    %p130 = scmp.eq.s32.totalorder %s129, 0
    %s132 = sadd.s32 %s131, 1
    %s133 = scalar_select %p130, %s131, %s132
    %p136 = pneg %p130
    %p137 = scmp.eq.s32.totalorder %s11, 1
    %p138 = por %p136, %p137
    %p139 = scmp.ne.s32.totalorder %s131, %s134
    %p140 = scmp.eq.s32.totalorder %s11, 0
    %p141 = por %p139, %p140
    %p142 = scmp.ne.s32.totalorder %s131, %s134
    %p143 = scmp.eq.s32.totalorder %s16, 1
    %p144 = por %p142, %p143
    %p145 = scmp.ne.s32.totalorder %s134, %s135
    %p146 = scmp.eq.s32.totalorder %s16, 0
    %p147 = por %p145, %p146
    %p148 = scmp.ne.s32.totalorder %s134, %s135
    %p149 = scmp.eq.s32.totalorder %s17, 1
    %p150 = por %p148, %p149
    %p152 = scmp.ne.s32.totalorder %s135, %s151
    %p153 = scmp.eq.s32.totalorder %s17, 0
    %p154 = por %p152, %p153
    %p155 = scmp.le.s32.totalorder 1, %s11
    %p156 = scmp.lt.s32.totalorder %s11, 3
    %p157 = pnand %p155, %p156
    %p158 = pneg %p157
    // Predicated region
    $region9: #{residual_block_forward.1} parent=5 // pred_check
      _
    $region10: #{residual_block_forward.1} parent=5 // pred_check_branch
      %160 = sbr.rel (%p157) target = $region12
    $region11: #{residual_block_forward.1} parent=5 // pred_region
      %s161 = ssub.s32 %s11, 1
      // Predicated region
      $region13: #{residual_block_forward.1} parent=11 // pred_check
        %p162 = pneg %p58
      $region14: #{residual_block_forward.1} parent=11 // pred_check_branch
        %164 = sbr.rel (%p162) target = $region16
      $region15: #{residual_block_forward.1} parent=11 // pred_region
        _
      $region16: #{residual_block_forward.1} parent=11 // pred_fallthru
        _
      // Predicated region
      $region17: #{residual_block_forward.1} parent=11 // pred_check
        %p165 = pneg %p79
      $region18: #{residual_block_forward.1} parent=11 // pred_check_branch
        %167 = sbr.rel (%p165) target = $region20
      $region19: #{residual_block_forward.1} parent=11 // pred_region
        _
      $region20: #{residual_block_forward.1} parent=11 // pred_fallthru
        _
      // Predicated region
      $region21: #{residual_block_forward.1} parent=11 // pred_check
        %p168 = pneg %p100
      $region22: #{residual_block_forward.1} parent=11 // pred_check_branch
        %170 = sbr.rel (%p168) target = $region24
      $region23: #{residual_block_forward.1} parent=11 // pred_region
        _
      $region24: #{residual_block_forward.1} parent=11 // pred_fallthru
        _
      // Predicated region
      $region25: #{residual_block_forward.1} parent=11 // pred_check
        %p171 = pneg %p121
      $region26: #{residual_block_forward.1} parent=11 // pred_check_branch
        %173 = sbr.rel (%p171) target = $region28
      $region27: #{residual_block_forward.1} parent=11 // pred_region
        _
      $region28: #{residual_block_forward.1} parent=11 // pred_fallthru
        _
    $region12: #{residual_block_forward.1} parent=5 // pred_fallthru
      _
    %p174 = scmp.lt.s32.totalorder %s11, 2
    // Predicated region
    $region29: #{residual_block_forward.1} parent=5 // pred_check
      %p175 = pneg %p174
    $region30: #{residual_block_forward.1} parent=5 // pred_check_branch
      %177 = sbr.rel (%p175) target = $region32
    $region31: #{residual_block_forward.1} parent=5 // pred_region
      // Predicated region
      $region33: #{residual_block_forward.1} parent=31 // pred_check
        %p178 = pneg %p31
      $region34: #{residual_block_forward.1} parent=31 // pred_check_branch
        %180 = sbr.rel (%p178) target = $region36
      $region35: #{residual_block_forward.1} parent=31 // pred_region
        %p181 = scmp.lt.s32.totalorder %s11, 1
        %s182 = scalar_select %p181, %s11, 1
        %s183 = smul.addr %s182, 2
        %s184 = smul.addr %s183, 4
        %s185 = scalar_lea.vmem %s0, %s184
      $region36: #{residual_block_forward.1} parent=31 // pred_fallthru
        _
    $region32: #{residual_block_forward.1} parent=5 // pred_fallthru
      _
    %p186 = scmp.le.s32.totalorder 1, %s11
    %p187 = scmp.lt.s32.totalorder %s11, 3
    %p188 = pnand %p186, %p187
    %p189 = pneg %p188
    // Predicated region
    $region37: #{residual_block_forward.1} parent=5 // pred_check
      _
    $region38: #{residual_block_forward.1} parent=5 // pred_check_branch
      %191 = sbr.rel (%p188) target = $region40
    $region39: #{residual_block_forward.1} parent=5 // pred_region
      %s192 = ssub.s32 %s11, 1
      %p193 = scmp.lt.s32.totalorder %s16, 1
      %s194 = scalar_select %p193, %s16, 1
      %s195 = smul.addr %s194, 2
      %s196 = smul.addr %s195, 4
      %s197 = scalar_lea.vmem %s0, %s196
      %p198 = pneg %p37
      %p199 = pneg %p34
      %p200 = pneg %p58
      %p201 = pneg %p55
      %p202 = pneg %p79
      %p203 = pneg %p76
      %p204 = pneg %p100
      %p205 = pneg %p97
      %p206 = pneg %p121
      %p207 = pneg %p118
      %p208 = pneg %p147
      %p209 = pneg %p144
      %p210 = scmp.lt.s32.totalorder %s16, 1
      %s211 = scalar_select %p210, %s16, 1
      %s212 = smul.addr %s211, 8
      %s213 = scalar_lea.vmem %s5, %s212
      %p214 = scmp.lt.s32.totalorder %s16, 1
      %s215 = scalar_select %p214, %s16, 1
      %s216 = smul.addr %s215, 2
      %s217 = smul.addr %s216, 4
      %s218 = scalar_lea.vmem %s0, %s217
      %p219 = scmp.lt.s32.totalorder %s16, 1
      %s220 = scalar_select %p219, %s16, 1
      %s221 = smul.addr %s220, 8
      %s222 = scalar_lea.vmem %s5, %s221
      %v223 = vld [vmem:[%s218] sm:$0xff]
      %v224 = vlaneseq
      %v225 = vand.u32 %v224, 127
      %v226 = vadd.s32 %v225, 128
      %vm227 = vcmp.lt.s32.totalorder %v225, 0
      %v228 = vsub.s32 0, %v225
      %v229 = vsel %vm227, %v228, %v225
      %v230 = vshrl.u32 %v229, 4
      %v231 = vand.u32 %v229, 15
      %v232 = vsub.s32 0, %v231
      %v233 = vsel %vm227, %v232, %v231
      %vm234 = vcmp.lt.s32.totalorder %v226, 0
      %v235 = vsub.s32 0, %v226
      %v236 = vsel %vm234, %v235, %v226
      %v237 = vshrl.u32 %v236, 4
      %v238 = vand.u32 %v236, 15
      %v239 = vsub.s32 0, %v238
      %v240 = vsel %vm234, %v239, %v238
      %vm241 = vcmp.ne.s32.totalorder %v233, 0
      %vm242 = vcmp.ne.s32.totalorder %v240, 0
      %vm243 = vcmp.lt.s32.totalorder %v233, 0
      %vm244 = vcmp.lt.s32.totalorder %v240, 0
      %vm245 = vmand %vm243, %vm241
      %vm246 = vmand %vm244, %vm242
      %v247 = vadd.s32 %v233, 16
      %v248 = vadd.s32 %v240, 16
      %v249 = vsel %vm245, %v247, %v233
      %v250 = vsel %vm246, %v248, %v240
      %vm251 = vcmp.ge.s32.totalorder %v249, 1
      %vm252 = vcmp.ge.s32.totalorder %v250, 1
      %vm253 = vcmp.le.s32.totalorder %v249, 14
      %vm254 = vcmp.le.s32.totalorder %v250, 14
      %v255 = vld [vmem:[%s1] sm:$0xf]
      %v256 = vld [vmem:[%s1 + $0x4] sm:$0xf]
      %v257 = vld [vmem:[%s1 + $0x8] sm:$0xf]
      %v258 = vld [vmem:[%s1 + $0xc] sm:$0xf]
      %v259 = vld [vmem:[%s1 + $0x10] sm:$0xf]
      %v260 = vld [vmem:[%s1 + $0x14] sm:$0xf]
      %v261 = vld [vmem:[%s1 + $0x18] sm:$0xf]
      %v262 = vld [vmem:[%s1 + $0x1c] sm:$0xf]
      %v263 = vld [vmem:[%s1 + $0x20] sm:$0xf]
      %v264 = vld [vmem:[%s3] sm:$0xf]
      %v265 = vld [vmem:[%s3 + $0x4] sm:$0xf]
      %v266 = vld [vmem:[%s3 + $0x8] sm:$0xf]
      %v267 = vld [vmem:[%s3 + $0xc] sm:$0xf]
      %v268 = vld [vmem:[%s3 + $0x10] sm:$0xf]
      %v269 = vld [vmem:[%s3 + $0x14] sm:$0xf]
      %v270 = vld [vmem:[%s3 + $0x18] sm:$0xf]
      %v271 = vld [vmem:[%s3 + $0x1c] sm:$0xf]
      %v272 = vld [vmem:[%s3 + $0x20] sm:$0xf]
      %v273 = vld [vmem:[%s2] sm:$0xf]
      %v274 = vld [vmem:[%s4] sm:$0xf]
      %v276 = vcombine.high %v223, %v223
      %277 = vrot.lane.b32.xlu0 %v223, 17
      %v278 = vpop.permute.xlu0 %277
      %279 = vrot.lane.b32.xlu0 %v276, 17
      %v280 = vpop.permute.xlu0 %279
      %vm281 = vcmask 138240
      %v282 = vsel %vm281, %v278, %v280
      %v286 = vsel %vm281, 0.0, %v278
      %v287 = vsel %vm281, %v280, 0.0
      %v288 = vsel %vm251, 1, 0
      %v289 = vsel %vm252, 1, 0
      %vm290 = vcmp.eq.s32.totalorder %v288, 1
      %vm291 = vcmp.eq.s32.totalorder %v289, 1
      %v292 = vsel %vm290, %v286, 0.0
      %v293 = vsel %vm291, %v282, 0.0
      %296 = vrot.lane.b32.xlu0 %v286, 127
      %v297 = vpop.permute.xlu0 %296
      %298 = vrot.lane.b32.xlu0 %v282, 127
      %v299 = vpop.permute.xlu0 %298
      %300 = vrot.lane.b32.xlu0 %v287, 127
      %v301 = vpop.permute.xlu0 %300
      %vm302 = vcmask 1039360
      %v303 = vsel %vm302, %v297, %v299
      %v304 = vsel %vm302, %v299, %v301
      %vm305 = vcmask 31744
      %v307 = vsel %vm305, %v256, 0
      %vm309 = vcmask 1043456
      %v310 = vsel %vm309, %v303, 0
      %v312 = vsel %vm309, %v304, 0
      %314 = vmatprep.subr.mxu0 0.0
      %315 = vmatpush1.msra.mxu0 0.0
      %316 = vmatprep.subr.mxu0 0.0
      %317 = vmatpush1.msra.mxu0 0.0
      %318 = vmatprep.subr.mxu0 0.0
      %319 = vmatpush1.msra.mxu0 0.0
      %320 = vmatprep.subr.mxu0 0.0
      %321 = vmatpush1.msra.mxu0 0.0
      %322 = vmatprep.subr.mxu0 0.0
      %323 = vmatpush1.msra.mxu0 0.0
      %324 = vmatprep.subr.mxu0 0.0
      %325 = vmatpush1.msra.mxu0 0.0
      %326 = vmatprep.subr.mxu0 0.0
      %327 = vmatpush1.msra.mxu0 0.0
      %328 = vmatprep.subr.mxu0 0.0
      %329 = vmatpush1.msra.mxu0 0.0
      %330 = vmatprep.subr.mxu0 0.0
      %331 = vmatpush1.msra.mxu0 0.0
      %332 = vmatprep.subr.mxu0 0.0
      %333 = vmatpush1.msra.mxu0 0.0
      %334 = vmatprep.subr.mxu0 0.0
      %335 = vmatpush1.msra.mxu0 0.0
      %336 = vmatprep.subr.mxu0 0.0
      %337 = vmatpush1.msra.mxu0 0.0
      %338 = vmatprep.subr.mxu0 0.0
      %339 = vmatpush1.msra.mxu0 0.0
      %340 = vmatprep.subr.mxu0 0.0
      %341 = vmatpush1.msra.mxu0 0.0
      %342 = vmatprep.subr.mxu0 0.0
      %343 = vmatpush1.msra.mxu0 0.0
      %344 = vmatprep.subr.mxu0 %v312
      %345 = vmatpush1.msra.mxu0 %v310
      %346 = vmatprep.subr.mxu0 0.0
      %347 = vmatpush2.msra.mxu0 0.0
      %348 = vmatprep.subr.mxu0 0.0
      %349 = vmatpush2.msra.mxu0 0.0
      %350 = vmatprep.subr.mxu0 0.0
      %351 = vmatpush2.msra.mxu0 0.0
      %352 = vmatprep.subr.mxu0 0.0
      %353 = vmatpush2.msra.mxu0 0.0
      %354 = vmatprep.subr.mxu0 0.0
      %355 = vmatpush2.msra.mxu0 0.0
      %356 = vmatprep.subr.mxu0 0.0
      %357 = vmatpush2.msra.mxu0 0.0
      %358 = vmatprep.subr.mxu0 0.0
      %359 = vmatpush2.msra.mxu0 0.0
      %360 = vmatprep.subr.mxu0 0.0
      %361 = vmatpush2.msra.mxu0 0.0
      %362 = vmatprep.subr.mxu0 0.0
      %363 = vmatpush2.msra.mxu0 0.0
      %364 = vmatprep.subr.mxu0 0.0
      %365 = vmatpush2.msra.mxu0 0.0
      %366 = vmatprep.subr.mxu0 0.0
      %367 = vmatpush2.msra.mxu0 0.0
      %368 = vmatprep.subr.mxu0 0.0
      %369 = vmatpush2.msra.mxu0 0.0
      %370 = vmatprep.subr.mxu0 0.0
      %371 = vmatpush2.msra.mxu0 0.0
      %372 = vmatprep.subr.mxu0 0.0
      %373 = vmatpush2.msra.mxu0 0.0
      %374 = vmatprep.subr.mxu0 0.0
      %375 = vmatpush2.msra.mxu0 0.0
      %376 = vmatprep.subr.mxu0 0.0
      %377 = vmatpush2.msra.mxu0 0.0
      %378 = vmatprep.mubr.f32.mxu0 0.0
      %379 = vmatmul.mubr.f32.gmra.mxu0 %v307
      %v380 = vpop.f32.mrf.mxu0
      %v381 = vadd.f32 0.0, %v380
      %v382 = vpop.f32.mrf.mxu0
      %v383 = vadd.f32 0.0, %v382
      %384 = vdwg.mxu0
      %v386 = vsel %vm305, %v255, 0
      %v389 = vsel %vm309, %v292, 0
      %v392 = vsel %vm309, %v293, 0
      %394 = vmatprep.subr.mxu0 0.0
      %395 = vmatpush1.msra.mxu0 0.0
      %396 = vmatprep.subr.mxu0 0.0
      %397 = vmatpush1.msra.mxu0 0.0
      %398 = vmatprep.subr.mxu0 0.0
      %399 = vmatpush1.msra.mxu0 0.0
      %400 = vmatprep.subr.mxu0 0.0
      %401 = vmatpush1.msra.mxu0 0.0
      %402 = vmatprep.subr.mxu0 0.0
      %403 = vmatpush1.msra.mxu0 0.0
      %404 = vmatprep.subr.mxu0 0.0
      %405 = vmatpush1.msra.mxu0 0.0
      %406 = vmatprep.subr.mxu0 0.0
      %407 = vmatpush1.msra.mxu0 0.0
      %408 = vmatprep.subr.mxu0 0.0
      %409 = vmatpush1.msra.mxu0 0.0
      %410 = vmatprep.subr.mxu0 0.0
      %411 = vmatpush1.msra.mxu0 0.0
      %412 = vmatprep.subr.mxu0 0.0
      %413 = vmatpush1.msra.mxu0 0.0
      %414 = vmatprep.subr.mxu0 0.0
      %415 = vmatpush1.msra.mxu0 0.0
      %416 = vmatprep.subr.mxu0 0.0
      %417 = vmatpush1.msra.mxu0 0.0
      %418 = vmatprep.subr.mxu0 0.0
      %419 = vmatpush1.msra.mxu0 0.0
      %420 = vmatprep.subr.mxu0 0.0
      %421 = vmatpush1.msra.mxu0 0.0
      %422 = vmatprep.subr.mxu0 0.0
      %423 = vmatpush1.msra.mxu0 0.0
      %424 = vmatprep.subr.mxu0 %v392
      %425 = vmatpush1.msra.mxu0 %v389
      %426 = vmatprep.subr.mxu0 0.0
      %427 = vmatpush2.msra.mxu0 0.0
      %428 = vmatprep.subr.mxu0 0.0
      %429 = vmatpush2.msra.mxu0 0.0
      %430 = vmatprep.subr.mxu0 0.0
      %431 = vmatpush2.msra.mxu0 0.0
      %432 = vmatprep.subr.mxu0 0.0
      %433 = vmatpush2.msra.mxu0 0.0
      %434 = vmatprep.subr.mxu0 0.0
      %435 = vmatpush2.msra.mxu0 0.0
      %436 = vmatprep.subr.mxu0 0.0
      %437 = vmatpush2.msra.mxu0 0.0
      %438 = vmatprep.subr.mxu0 0.0
      %439 = vmatpush2.msra.mxu0 0.0
      %440 = vmatprep.subr.mxu0 0.0
      %441 = vmatpush2.msra.mxu0 0.0
      %442 = vmatprep.subr.mxu0 0.0
      %443 = vmatpush2.msra.mxu0 0.0
      %444 = vmatprep.subr.mxu0 0.0
      %445 = vmatpush2.msra.mxu0 0.0
      %446 = vmatprep.subr.mxu0 0.0
      %447 = vmatpush2.msra.mxu0 0.0
      %448 = vmatprep.subr.mxu0 0.0
      %449 = vmatpush2.msra.mxu0 0.0
      %450 = vmatprep.subr.mxu0 0.0
      %451 = vmatpush2.msra.mxu0 0.0
      %452 = vmatprep.subr.mxu0 0.0
      %453 = vmatpush2.msra.mxu0 0.0
      %454 = vmatprep.subr.mxu0 0.0
      %455 = vmatpush2.msra.mxu0 0.0
      %456 = vmatprep.subr.mxu0 0.0
      %457 = vmatpush2.msra.mxu0 0.0
      %458 = vmatprep.mubr.f32.mxu0 0.0
      %459 = vmatmul.mubr.f32.gmra.mxu0 %v386
      %v460 = vpop.f32.mrf.mxu0
      %v461 = vadd.f32 %v381, %v460
      %v462 = vpop.f32.mrf.mxu0
      %v463 = vadd.f32 %v383, %v462
      %464 = vdwg.mxu0
      %v465 = vsel %vm253, 1, 0
      %v466 = vsel %vm254, 1, 0
      %vm467 = vcmp.eq.s32.totalorder %v465, 1
      %vm468 = vcmp.eq.s32.totalorder %v466, 1
      %469 = vrot.lane.b32.xlu0 %v286, 126
      %v470 = vpop.permute.xlu0 %469
      %471 = vrot.lane.b32.xlu0 %v282, 126
      %v472 = vpop.permute.xlu0 %471
      %473 = vrot.lane.b32.xlu0 %v287, 126
      %v474 = vpop.permute.xlu0 %473
      %vm475 = vcmask 1031168
      %v476 = vsel %vm475, %v470, %v472
      %v477 = vsel %vm475, %v472, %v474
      %v480 = vsel %vm467, %v476, 0.0
      %v481 = vsel %vm468, %v477, 0.0
      %v483 = vsel %vm305, %v257, 0
      %v486 = vsel %vm309, %v480, 0
      %v489 = vsel %vm309, %v481, 0
      %491 = vmatprep.subr.mxu0 0.0
      %492 = vmatpush1.msra.mxu0 0.0
      %493 = vmatprep.subr.mxu0 0.0
      %494 = vmatpush1.msra.mxu0 0.0
      %495 = vmatprep.subr.mxu0 0.0
      %496 = vmatpush1.msra.mxu0 0.0
      %497 = vmatprep.subr.mxu0 0.0
      %498 = vmatpush1.msra.mxu0 0.0
      %499 = vmatprep.subr.mxu0 0.0
      %500 = vmatpush1.msra.mxu0 0.0
      %501 = vmatprep.subr.mxu0 0.0
      %502 = vmatpush1.msra.mxu0 0.0
      %503 = vmatprep.subr.mxu0 0.0
      %504 = vmatpush1.msra.mxu0 0.0
      %505 = vmatprep.subr.mxu0 0.0
      %506 = vmatpush1.msra.mxu0 0.0
      %507 = vmatprep.subr.mxu0 0.0
      %508 = vmatpush1.msra.mxu0 0.0
      %509 = vmatprep.subr.mxu0 0.0
      %510 = vmatpush1.msra.mxu0 0.0
      %511 = vmatprep.subr.mxu0 0.0
      %512 = vmatpush1.msra.mxu0 0.0
      %513 = vmatprep.subr.mxu0 0.0
      %514 = vmatpush1.msra.mxu0 0.0
      %515 = vmatprep.subr.mxu0 0.0
      %516 = vmatpush1.msra.mxu0 0.0
      %517 = vmatprep.subr.mxu0 0.0
      %518 = vmatpush1.msra.mxu0 0.0
      %519 = vmatprep.subr.mxu0 0.0
      %520 = vmatpush1.msra.mxu0 0.0
      %521 = vmatprep.subr.mxu0 %v489
      %522 = vmatpush1.msra.mxu0 %v486
      %523 = vmatprep.subr.mxu0 0.0
      %524 = vmatpush2.msra.mxu0 0.0
      %525 = vmatprep.subr.mxu0 0.0
      %526 = vmatpush2.msra.mxu0 0.0
      %527 = vmatprep.subr.mxu0 0.0
      %528 = vmatpush2.msra.mxu0 0.0
      %529 = vmatprep.subr.mxu0 0.0
      %530 = vmatpush2.msra.mxu0 0.0
      %531 = vmatprep.subr.mxu0 0.0
      %532 = vmatpush2.msra.mxu0 0.0
      %533 = vmatprep.subr.mxu0 0.0
      %534 = vmatpush2.msra.mxu0 0.0
      %535 = vmatprep.subr.mxu0 0.0
      %536 = vmatpush2.msra.mxu0 0.0
      %537 = vmatprep.subr.mxu0 0.0
      %538 = vmatpush2.msra.mxu0 0.0
      %539 = vmatprep.subr.mxu0 0.0
      %540 = vmatpush2.msra.mxu0 0.0
      %541 = vmatprep.subr.mxu0 0.0
      %542 = vmatpush2.msra.mxu0 0.0
      %543 = vmatprep.subr.mxu0 0.0
      %544 = vmatpush2.msra.mxu0 0.0
      %545 = vmatprep.subr.mxu0 0.0
      %546 = vmatpush2.msra.mxu0 0.0
      %547 = vmatprep.subr.mxu0 0.0
      %548 = vmatpush2.msra.mxu0 0.0
      %549 = vmatprep.subr.mxu0 0.0
      %550 = vmatpush2.msra.mxu0 0.0
      %551 = vmatprep.subr.mxu0 0.0
      %552 = vmatpush2.msra.mxu0 0.0
      %553 = vmatprep.subr.mxu0 0.0
      %554 = vmatpush2.msra.mxu0 0.0
      %555 = vmatprep.mubr.f32.mxu0 0.0
      %556 = vmatmul.mubr.f32.gmra.mxu0 %v483
      %v557 = vpop.f32.mrf.mxu0
      %v558 = vadd.f32 0.0, %v557
      %v559 = vpop.f32.mrf.mxu0
      %v560 = vadd.f32 0.0, %v559
      %561 = vdwg.mxu0
      %v562 = vadd.f32 %v461, %v558
      %v563 = vadd.f32 %v463, %v560
      %564 = vrot.lane.b32.xlu0 %v286, 112
      %v565 = vpop.permute.xlu0 %564
      %566 = vrot.lane.b32.xlu0 %v282, 112
      %v567 = vpop.permute.xlu0 %566
      %568 = vrot.lane.b32.xlu0 %v287, 112
      %v569 = vpop.permute.xlu0 %568
      %vm570 = vcmask 916480
      %v571 = vsel %vm570, %v565, %v567
      %v572 = vsel %vm570, %v567, %v569
      %v575 = vsel %vm290, %v571, 0.0
      %v576 = vsel %vm291, %v572, 0.0
      %v578 = vsel %vm305, %v258, 0
      %v581 = vsel %vm309, %v575, 0
      %v584 = vsel %vm309, %v576, 0
      %586 = vmatprep.subr.mxu0 0.0
      %587 = vmatpush1.msra.mxu0 0.0
      %588 = vmatprep.subr.mxu0 0.0
      %589 = vmatpush1.msra.mxu0 0.0
      %590 = vmatprep.subr.mxu0 0.0
      %591 = vmatpush1.msra.mxu0 0.0
      %592 = vmatprep.subr.mxu0 0.0
      %593 = vmatpush1.msra.mxu0 0.0
      %594 = vmatprep.subr.mxu0 0.0
      %595 = vmatpush1.msra.mxu0 0.0
      %596 = vmatprep.subr.mxu0 0.0
      %597 = vmatpush1.msra.mxu0 0.0
      %598 = vmatprep.subr.mxu0 0.0
      %599 = vmatpush1.msra.mxu0 0.0
      %600 = vmatprep.subr.mxu0 0.0
      %601 = vmatpush1.msra.mxu0 0.0
      %602 = vmatprep.subr.mxu0 0.0
      %603 = vmatpush1.msra.mxu0 0.0
      %604 = vmatprep.subr.mxu0 0.0
      %605 = vmatpush1.msra.mxu0 0.0
      %606 = vmatprep.subr.mxu0 0.0
      %607 = vmatpush1.msra.mxu0 0.0
      %608 = vmatprep.subr.mxu0 0.0
      %609 = vmatpush1.msra.mxu0 0.0
      %610 = vmatprep.subr.mxu0 0.0
      %611 = vmatpush1.msra.mxu0 0.0
      %612 = vmatprep.subr.mxu0 0.0
      %613 = vmatpush1.msra.mxu0 0.0
      %614 = vmatprep.subr.mxu0 0.0
      %615 = vmatpush1.msra.mxu0 0.0
      %616 = vmatprep.subr.mxu0 %v584
      %617 = vmatpush1.msra.mxu0 %v581
      %618 = vmatprep.subr.mxu0 0.0
      %619 = vmatpush2.msra.mxu0 0.0
      %620 = vmatprep.subr.mxu0 0.0
      %621 = vmatpush2.msra.mxu0 0.0
      %622 = vmatprep.subr.mxu0 0.0
      %623 = vmatpush2.msra.mxu0 0.0
      %624 = vmatprep.subr.mxu0 0.0
      %625 = vmatpush2.msra.mxu0 0.0
      %626 = vmatprep.subr.mxu0 0.0
      %627 = vmatpush2.msra.mxu0 0.0
      %628 = vmatprep.subr.mxu0 0.0
      %629 = vmatpush2.msra.mxu0 0.0
      %630 = vmatprep.subr.mxu0 0.0
      %631 = vmatpush2.msra.mxu0 0.0
      %632 = vmatprep.subr.mxu0 0.0
      %633 = vmatpush2.msra.mxu0 0.0
      %634 = vmatprep.subr.mxu0 0.0
      %635 = vmatpush2.msra.mxu0 0.0
      %636 = vmatprep.subr.mxu0 0.0
      %637 = vmatpush2.msra.mxu0 0.0
      %638 = vmatprep.subr.mxu0 0.0
      %639 = vmatpush2.msra.mxu0 0.0
      %640 = vmatprep.subr.mxu0 0.0
      %641 = vmatpush2.msra.mxu0 0.0
      %642 = vmatprep.subr.mxu0 0.0
      %643 = vmatpush2.msra.mxu0 0.0
      %644 = vmatprep.subr.mxu0 0.0
      %645 = vmatpush2.msra.mxu0 0.0
      %646 = vmatprep.subr.mxu0 0.0
      %647 = vmatpush2.msra.mxu0 0.0
      %648 = vmatprep.subr.mxu0 0.0
      %649 = vmatpush2.msra.mxu0 0.0
      %650 = vmatprep.mubr.f32.mxu0 0.0
      %651 = vmatmul.mubr.f32.gmra.mxu0 %v578
      %v652 = vpop.f32.mrf.mxu0
      %v653 = vadd.f32 0.0, %v652
      %v654 = vpop.f32.mrf.mxu0
      %v655 = vadd.f32 0.0, %v654
      %656 = vdwg.mxu0
      %v657 = vadd.f32 %v562, %v653
      %v658 = vadd.f32 %v563, %v655
      %659 = vrot.lane.b32.xlu0 %v286, 111
      %v660 = vpop.permute.xlu0 %659
      %661 = vrot.lane.b32.xlu0 %v282, 111
      %v662 = vpop.permute.xlu0 %661
      %663 = vrot.lane.b32.xlu0 %v287, 111
      %v664 = vpop.permute.xlu0 %663
      %vm665 = vcmask 908288
      %v666 = vsel %vm665, %v660, %v662
      %v667 = vsel %vm665, %v662, %v664
      %v669 = vsel %vm305, %v259, 0
      %v671 = vsel %vm309, %v666, 0
      %v673 = vsel %vm309, %v667, 0
      %675 = vmatprep.subr.mxu0 0.0
      %676 = vmatpush1.msra.mxu0 0.0
      %677 = vmatprep.subr.mxu0 0.0
      %678 = vmatpush1.msra.mxu0 0.0
      %679 = vmatprep.subr.mxu0 0.0
      %680 = vmatpush1.msra.mxu0 0.0
      %681 = vmatprep.subr.mxu0 0.0
      %682 = vmatpush1.msra.mxu0 0.0
      %683 = vmatprep.subr.mxu0 0.0
      %684 = vmatpush1.msra.mxu0 0.0
      %685 = vmatprep.subr.mxu0 0.0
      %686 = vmatpush1.msra.mxu0 0.0
      %687 = vmatprep.subr.mxu0 0.0
      %688 = vmatpush1.msra.mxu0 0.0
      %689 = vmatprep.subr.mxu0 0.0
      %690 = vmatpush1.msra.mxu0 0.0
      %691 = vmatprep.subr.mxu0 0.0
      %692 = vmatpush1.msra.mxu0 0.0
      %693 = vmatprep.subr.mxu0 0.0
      %694 = vmatpush1.msra.mxu0 0.0
      %695 = vmatprep.subr.mxu0 0.0
      %696 = vmatpush1.msra.mxu0 0.0
      %697 = vmatprep.subr.mxu0 0.0
      %698 = vmatpush1.msra.mxu0 0.0
      %699 = vmatprep.subr.mxu0 0.0
      %700 = vmatpush1.msra.mxu0 0.0
      %701 = vmatprep.subr.mxu0 0.0
      %702 = vmatpush1.msra.mxu0 0.0
      %703 = vmatprep.subr.mxu0 0.0
      %704 = vmatpush1.msra.mxu0 0.0
      %705 = vmatprep.subr.mxu0 %v673
      %706 = vmatpush1.msra.mxu0 %v671
      %707 = vmatprep.subr.mxu0 0.0
      %708 = vmatpush2.msra.mxu0 0.0
      %709 = vmatprep.subr.mxu0 0.0
      %710 = vmatpush2.msra.mxu0 0.0
      %711 = vmatprep.subr.mxu0 0.0
      %712 = vmatpush2.msra.mxu0 0.0
      %713 = vmatprep.subr.mxu0 0.0
      %714 = vmatpush2.msra.mxu0 0.0
      %715 = vmatprep.subr.mxu0 0.0
      %716 = vmatpush2.msra.mxu0 0.0
      %717 = vmatprep.subr.mxu0 0.0
      %718 = vmatpush2.msra.mxu0 0.0
      %719 = vmatprep.subr.mxu0 0.0
      %720 = vmatpush2.msra.mxu0 0.0
      %721 = vmatprep.subr.mxu0 0.0
      %722 = vmatpush2.msra.mxu0 0.0
      %723 = vmatprep.subr.mxu0 0.0
      %724 = vmatpush2.msra.mxu0 0.0
      %725 = vmatprep.subr.mxu0 0.0
      %726 = vmatpush2.msra.mxu0 0.0
      %727 = vmatprep.subr.mxu0 0.0
      %728 = vmatpush2.msra.mxu0 0.0
      %729 = vmatprep.subr.mxu0 0.0
      %730 = vmatpush2.msra.mxu0 0.0
      %731 = vmatprep.subr.mxu0 0.0
      %732 = vmatpush2.msra.mxu0 0.0
      %733 = vmatprep.subr.mxu0 0.0
      %734 = vmatpush2.msra.mxu0 0.0
      %735 = vmatprep.subr.mxu0 0.0
      %736 = vmatpush2.msra.mxu0 0.0
      %737 = vmatprep.subr.mxu0 0.0
      %738 = vmatpush2.msra.mxu0 0.0
      %739 = vmatprep.mubr.f32.mxu0 0.0
      %740 = vmatmul.mubr.f32.gmra.mxu0 %v669
      %v741 = vpop.f32.mrf.mxu0
      %v742 = vadd.f32 0.0, %v741
      %v743 = vpop.f32.mrf.mxu0
      %v744 = vadd.f32 0.0, %v743
      %745 = vdwg.mxu0
      %v746 = vadd.f32 %v657, %v742
      %v747 = vadd.f32 %v658, %v744
      %748 = vrot.lane.b32.xlu0 %v286, 110
      %v749 = vpop.permute.xlu0 %748
      %750 = vrot.lane.b32.xlu0 %v282, 110
      %v751 = vpop.permute.xlu0 %750
      %752 = vrot.lane.b32.xlu0 %v287, 110
      %v753 = vpop.permute.xlu0 %752
      %vm754 = vcmask 900096
      %v755 = vsel %vm754, %v749, %v751
      %v756 = vsel %vm754, %v751, %v753
      %v759 = vsel %vm467, %v755, 0.0
      %v760 = vsel %vm468, %v756, 0.0
      %v762 = vsel %vm305, %v260, 0
      %v765 = vsel %vm309, %v759, 0
      %v768 = vsel %vm309, %v760, 0
      %770 = vmatprep.subr.mxu0 0.0
      %771 = vmatpush1.msra.mxu0 0.0
      %772 = vmatprep.subr.mxu0 0.0
      %773 = vmatpush1.msra.mxu0 0.0
      %774 = vmatprep.subr.mxu0 0.0
      %775 = vmatpush1.msra.mxu0 0.0
      %776 = vmatprep.subr.mxu0 0.0
      %777 = vmatpush1.msra.mxu0 0.0
      %778 = vmatprep.subr.mxu0 0.0
      %779 = vmatpush1.msra.mxu0 0.0
      %780 = vmatprep.subr.mxu0 0.0
      %781 = vmatpush1.msra.mxu0 0.0
      %782 = vmatprep.subr.mxu0 0.0
      %783 = vmatpush1.msra.mxu0 0.0
      %784 = vmatprep.subr.mxu0 0.0
      %785 = vmatpush1.msra.mxu0 0.0
      %786 = vmatprep.subr.mxu0 0.0
      %787 = vmatpush1.msra.mxu0 0.0
      %788 = vmatprep.subr.mxu0 0.0
      %789 = vmatpush1.msra.mxu0 0.0
      %790 = vmatprep.subr.mxu0 0.0
      %791 = vmatpush1.msra.mxu0 0.0
      %792 = vmatprep.subr.mxu0 0.0
      %793 = vmatpush1.msra.mxu0 0.0
      %794 = vmatprep.subr.mxu0 0.0
      %795 = vmatpush1.msra.mxu0 0.0
      %796 = vmatprep.subr.mxu0 0.0
      %797 = vmatpush1.msra.mxu0 0.0
      %798 = vmatprep.subr.mxu0 0.0
      %799 = vmatpush1.msra.mxu0 0.0
      %800 = vmatprep.subr.mxu0 %v768
      %801 = vmatpush1.msra.mxu0 %v765
      %802 = vmatprep.subr.mxu0 0.0
      %803 = vmatpush2.msra.mxu0 0.0
      %804 = vmatprep.subr.mxu0 0.0
      %805 = vmatpush2.msra.mxu0 0.0
      %806 = vmatprep.subr.mxu0 0.0
      %807 = vmatpush2.msra.mxu0 0.0
      %808 = vmatprep.subr.mxu0 0.0
      %809 = vmatpush2.msra.mxu0 0.0
      %810 = vmatprep.subr.mxu0 0.0
      %811 = vmatpush2.msra.mxu0 0.0
      %812 = vmatprep.subr.mxu0 0.0
      %813 = vmatpush2.msra.mxu0 0.0
      %814 = vmatprep.subr.mxu0 0.0
      %815 = vmatpush2.msra.mxu0 0.0
      %816 = vmatprep.subr.mxu0 0.0
      %817 = vmatpush2.msra.mxu0 0.0
      %818 = vmatprep.subr.mxu0 0.0
      %819 = vmatpush2.msra.mxu0 0.0
      %820 = vmatprep.subr.mxu0 0.0
      %821 = vmatpush2.msra.mxu0 0.0
      %822 = vmatprep.subr.mxu0 0.0
      %823 = vmatpush2.msra.mxu0 0.0
      %824 = vmatprep.subr.mxu0 0.0
      %825 = vmatpush2.msra.mxu0 0.0
      %826 = vmatprep.subr.mxu0 0.0
      %827 = vmatpush2.msra.mxu0 0.0
      %828 = vmatprep.subr.mxu0 0.0
      %829 = vmatpush2.msra.mxu0 0.0
      %830 = vmatprep.subr.mxu0 0.0
      %831 = vmatpush2.msra.mxu0 0.0
      %832 = vmatprep.subr.mxu0 0.0
      %833 = vmatpush2.msra.mxu0 0.0
      %834 = vmatprep.mubr.f32.mxu0 0.0
      %835 = vmatmul.mubr.f32.gmra.mxu0 %v762
      %v836 = vpop.f32.mrf.mxu0
      %v837 = vadd.f32 0.0, %v836
      %v838 = vpop.f32.mrf.mxu0
      %v839 = vadd.f32 0.0, %v838
      %840 = vdwg.mxu0
      %v841 = vadd.f32 %v746, %v837
      %v842 = vadd.f32 %v747, %v839
      %843 = vrot.lane.b32.xlu0 %v286, 96
      %v844 = vpop.permute.xlu0 %843
      %845 = vrot.lane.b32.xlu0 %v282, 96
      %v846 = vpop.permute.xlu0 %845
      %847 = vrot.lane.b32.xlu0 %v287, 96
      %v848 = vpop.permute.xlu0 %847
      %vm849 = vcmask 785408
      %v850 = vsel %vm849, %v844, %v846
      %v851 = vsel %vm849, %v846, %v848
      %v854 = vsel %vm290, %v850, 0.0
      %v855 = vsel %vm291, %v851, 0.0
      %v857 = vsel %vm305, %v261, 0
      %v860 = vsel %vm309, %v854, 0
      %v863 = vsel %vm309, %v855, 0
      %865 = vmatprep.subr.mxu0 0.0
      %866 = vmatpush1.msra.mxu0 0.0
      %867 = vmatprep.subr.mxu0 0.0
      %868 = vmatpush1.msra.mxu0 0.0
      %869 = vmatprep.subr.mxu0 0.0
      %870 = vmatpush1.msra.mxu0 0.0
      %871 = vmatprep.subr.mxu0 0.0
      %872 = vmatpush1.msra.mxu0 0.0
      %873 = vmatprep.subr.mxu0 0.0
      %874 = vmatpush1.msra.mxu0 0.0
      %875 = vmatprep.subr.mxu0 0.0
      %876 = vmatpush1.msra.mxu0 0.0
      %877 = vmatprep.subr.mxu0 0.0
      %878 = vmatpush1.msra.mxu0 0.0
      %879 = vmatprep.subr.mxu0 0.0
      %880 = vmatpush1.msra.mxu0 0.0
      %881 = vmatprep.subr.mxu0 0.0
      %882 = vmatpush1.msra.mxu0 0.0
      %883 = vmatprep.subr.mxu0 0.0
      %884 = vmatpush1.msra.mxu0 0.0
      %885 = vmatprep.subr.mxu0 0.0
      %886 = vmatpush1.msra.mxu0 0.0
      %887 = vmatprep.subr.mxu0 0.0
      %888 = vmatpush1.msra.mxu0 0.0
      %889 = vmatprep.subr.mxu0 0.0
      %890 = vmatpush1.msra.mxu0 0.0
      %891 = vmatprep.subr.mxu0 0.0
      %892 = vmatpush1.msra.mxu0 0.0
      %893 = vmatprep.subr.mxu0 0.0
      %894 = vmatpush1.msra.mxu0 0.0
      %895 = vmatprep.subr.mxu0 %v863
      %896 = vmatpush1.msra.mxu0 %v860
      %897 = vmatprep.subr.mxu0 0.0
      %898 = vmatpush2.msra.mxu0 0.0
      %899 = vmatprep.subr.mxu0 0.0
      %900 = vmatpush2.msra.mxu0 0.0
      %901 = vmatprep.subr.mxu0 0.0
      %902 = vmatpush2.msra.mxu0 0.0
      %903 = vmatprep.subr.mxu0 0.0
      %904 = vmatpush2.msra.mxu0 0.0
      %905 = vmatprep.subr.mxu0 0.0
      %906 = vmatpush2.msra.mxu0 0.0
      %907 = vmatprep.subr.mxu0 0.0
      %908 = vmatpush2.msra.mxu0 0.0
      %909 = vmatprep.subr.mxu0 0.0
      %910 = vmatpush2.msra.mxu0 0.0
      %911 = vmatprep.subr.mxu0 0.0
      %912 = vmatpush2.msra.mxu0 0.0
      %913 = vmatprep.subr.mxu0 0.0
      %914 = vmatpush2.msra.mxu0 0.0
      %915 = vmatprep.subr.mxu0 0.0
      %916 = vmatpush2.msra.mxu0 0.0
      %917 = vmatprep.subr.mxu0 0.0
      %918 = vmatpush2.msra.mxu0 0.0
      %919 = vmatprep.subr.mxu0 0.0
      %920 = vmatpush2.msra.mxu0 0.0
      %921 = vmatprep.subr.mxu0 0.0
      %922 = vmatpush2.msra.mxu0 0.0
      %923 = vmatprep.subr.mxu0 0.0
      %924 = vmatpush2.msra.mxu0 0.0
      %925 = vmatprep.subr.mxu0 0.0
      %926 = vmatpush2.msra.mxu0 0.0
      %927 = vmatprep.subr.mxu0 0.0
      %928 = vmatpush2.msra.mxu0 0.0
      %929 = vmatprep.mubr.f32.mxu0 0.0
      %930 = vmatmul.mubr.f32.gmra.mxu0 %v857
      %v931 = vpop.f32.mrf.mxu0
      %v932 = vadd.f32 0.0, %v931
      %v933 = vpop.f32.mrf.mxu0
      %v934 = vadd.f32 0.0, %v933
      %935 = vdwg.mxu0
      %v936 = vadd.f32 %v841, %v932
      %v937 = vadd.f32 %v842, %v934
      %938 = vrot.lane.b32.xlu0 %v286, 95
      %v939 = vpop.permute.xlu0 %938
      %940 = vrot.lane.b32.xlu0 %v282, 95
      %v941 = vpop.permute.xlu0 %940
      %942 = vrot.lane.b32.xlu0 %v287, 95
      %v943 = vpop.permute.xlu0 %942
      %vm944 = vcmask 777216
      %v945 = vsel %vm944, %v939, %v941
      %v946 = vsel %vm944, %v941, %v943
      %v948 = vsel %vm305, %v262, 0
      %v950 = vsel %vm309, %v945, 0
      %v952 = vsel %vm309, %v946, 0
      %954 = vmatprep.subr.mxu0 0.0
      %955 = vmatpush1.msra.mxu0 0.0
      %956 = vmatprep.subr.mxu0 0.0
      %957 = vmatpush1.msra.mxu0 0.0
      %958 = vmatprep.subr.mxu0 0.0
      %959 = vmatpush1.msra.mxu0 0.0
      %960 = vmatprep.subr.mxu0 0.0
      %961 = vmatpush1.msra.mxu0 0.0
      %962 = vmatprep.subr.mxu0 0.0
      %963 = vmatpush1.msra.mxu0 0.0
      %964 = vmatprep.subr.mxu0 0.0
      %965 = vmatpush1.msra.mxu0 0.0
      %966 = vmatprep.subr.mxu0 0.0
      %967 = vmatpush1.msra.mxu0 0.0
      %968 = vmatprep.subr.mxu0 0.0
      %969 = vmatpush1.msra.mxu0 0.0
      %970 = vmatprep.subr.mxu0 0.0
      %971 = vmatpush1.msra.mxu0 0.0
      %972 = vmatprep.subr.mxu0 0.0
      %973 = vmatpush1.msra.mxu0 0.0
      %974 = vmatprep.subr.mxu0 0.0
      %975 = vmatpush1.msra.mxu0 0.0
      %976 = vmatprep.subr.mxu0 0.0
      %977 = vmatpush1.msra.mxu0 0.0
      %978 = vmatprep.subr.mxu0 0.0
      %979 = vmatpush1.msra.mxu0 0.0
      %980 = vmatprep.subr.mxu0 0.0
      %981 = vmatpush1.msra.mxu0 0.0
      %982 = vmatprep.subr.mxu0 0.0
      %983 = vmatpush1.msra.mxu0 0.0
      %984 = vmatprep.subr.mxu0 %v952
      %985 = vmatpush1.msra.mxu0 %v950
      %986 = vmatprep.subr.mxu0 0.0
      %987 = vmatpush2.msra.mxu0 0.0
      %988 = vmatprep.subr.mxu0 0.0
      %989 = vmatpush2.msra.mxu0 0.0
      %990 = vmatprep.subr.mxu0 0.0
      %991 = vmatpush2.msra.mxu0 0.0
      %992 = vmatprep.subr.mxu0 0.0
      %993 = vmatpush2.msra.mxu0 0.0
      %994 = vmatprep.subr.mxu0 0.0
      %995 = vmatpush2.msra.mxu0 0.0
      %996 = vmatprep.subr.mxu0 0.0
      %997 = vmatpush2.msra.mxu0 0.0
      %998 = vmatprep.subr.mxu0 0.0
      %999 = vmatpush2.msra.mxu0 0.0
      %1000 = vmatprep.subr.mxu0 0.0
      %1001 = vmatpush2.msra.mxu0 0.0
      %1002 = vmatprep.subr.mxu0 0.0
      %1003 = vmatpush2.msra.mxu0 0.0
      %1004 = vmatprep.subr.mxu0 0.0
      %1005 = vmatpush2.msra.mxu0 0.0
      %1006 = vmatprep.subr.mxu0 0.0
      %1007 = vmatpush2.msra.mxu0 0.0
      %1008 = vmatprep.subr.mxu0 0.0
      %1009 = vmatpush2.msra.mxu0 0.0
      %1010 = vmatprep.subr.mxu0 0.0
      %1011 = vmatpush2.msra.mxu0 0.0
      %1012 = vmatprep.subr.mxu0 0.0
      %1013 = vmatpush2.msra.mxu0 0.0
      %1014 = vmatprep.subr.mxu0 0.0
      %1015 = vmatpush2.msra.mxu0 0.0
      %1016 = vmatprep.subr.mxu0 0.0
      %1017 = vmatpush2.msra.mxu0 0.0
      %1018 = vmatprep.mubr.f32.mxu0 0.0
      %1019 = vmatmul.mubr.f32.gmra.mxu0 %v948
      %v1020 = vpop.f32.mrf.mxu0
      %v1021 = vadd.f32 0.0, %v1020
      %v1022 = vpop.f32.mrf.mxu0
      %v1023 = vadd.f32 0.0, %v1022
      %1024 = vdwg.mxu0
      %v1025 = vadd.f32 %v936, %v1021
      %v1026 = vadd.f32 %v937, %v1023
      %1027 = vrot.lane.b32.xlu0 %v286, 94
      %v1028 = vpop.permute.xlu0 %1027
      %1029 = vrot.lane.b32.xlu0 %v282, 94
      %v1030 = vpop.permute.xlu0 %1029
      %1031 = vrot.lane.b32.xlu0 %v287, 94
      %v1032 = vpop.permute.xlu0 %1031
      %vm1033 = vcmask 769024
      %v1034 = vsel %vm1033, %v1028, %v1030
      %v1035 = vsel %vm1033, %v1030, %v1032
      %v1038 = vsel %vm467, %v1034, 0.0
      %v1039 = vsel %vm468, %v1035, 0.0
      %v1041 = vsel %vm305, %v263, 0
      %v1044 = vsel %vm309, %v1038, 0
      %v1047 = vsel %vm309, %v1039, 0
      %1049 = vmatprep.subr.mxu0 0.0
      %1050 = vmatpush1.msra.mxu0 0.0
      %1051 = vmatprep.subr.mxu0 0.0
      %1052 = vmatpush1.msra.mxu0 0.0
      %1053 = vmatprep.subr.mxu0 0.0
      %1054 = vmatpush1.msra.mxu0 0.0
      %1055 = vmatprep.subr.mxu0 0.0
      %1056 = vmatpush1.msra.mxu0 0.0
      %1057 = vmatprep.subr.mxu0 0.0
      %1058 = vmatpush1.msra.mxu0 0.0
      %1059 = vmatprep.subr.mxu0 0.0
      %1060 = vmatpush1.msra.mxu0 0.0
      %1061 = vmatprep.subr.mxu0 0.0
      %1062 = vmatpush1.msra.mxu0 0.0
      %1063 = vmatprep.subr.mxu0 0.0
      %1064 = vmatpush1.msra.mxu0 0.0
      %1065 = vmatprep.subr.mxu0 0.0
      %1066 = vmatpush1.msra.mxu0 0.0
      %1067 = vmatprep.subr.mxu0 0.0
      %1068 = vmatpush1.msra.mxu0 0.0
      %1069 = vmatprep.subr.mxu0 0.0
      %1070 = vmatpush1.msra.mxu0 0.0
      %1071 = vmatprep.subr.mxu0 0.0
      %1072 = vmatpush1.msra.mxu0 0.0
      %1073 = vmatprep.subr.mxu0 0.0
      %1074 = vmatpush1.msra.mxu0 0.0
      %1075 = vmatprep.subr.mxu0 0.0
      %1076 = vmatpush1.msra.mxu0 0.0
      %1077 = vmatprep.subr.mxu0 0.0
      %1078 = vmatpush1.msra.mxu0 0.0
      %1079 = vmatprep.subr.mxu0 %v1047
      %1080 = vmatpush1.msra.mxu0 %v1044
      %1081 = vmatprep.subr.mxu0 0.0
      %1082 = vmatpush2.msra.mxu0 0.0
      %1083 = vmatprep.subr.mxu0 0.0
      %1084 = vmatpush2.msra.mxu0 0.0
      %1085 = vmatprep.subr.mxu0 0.0
      %1086 = vmatpush2.msra.mxu0 0.0
      %1087 = vmatprep.subr.mxu0 0.0
      %1088 = vmatpush2.msra.mxu0 0.0
      %1089 = vmatprep.subr.mxu0 0.0
      %1090 = vmatpush2.msra.mxu0 0.0
      %1091 = vmatprep.subr.mxu0 0.0
      %1092 = vmatpush2.msra.mxu0 0.0
      %1093 = vmatprep.subr.mxu0 0.0
      %1094 = vmatpush2.msra.mxu0 0.0
      %1095 = vmatprep.subr.mxu0 0.0
      %1096 = vmatpush2.msra.mxu0 0.0
      %1097 = vmatprep.subr.mxu0 0.0
      %1098 = vmatpush2.msra.mxu0 0.0
      %1099 = vmatprep.subr.mxu0 0.0
      %1100 = vmatpush2.msra.mxu0 0.0
      %1101 = vmatprep.subr.mxu0 0.0
      %1102 = vmatpush2.msra.mxu0 0.0
      %1103 = vmatprep.subr.mxu0 0.0
      %1104 = vmatpush2.msra.mxu0 0.0
      %1105 = vmatprep.subr.mxu0 0.0
      %1106 = vmatpush2.msra.mxu0 0.0
      %1107 = vmatprep.subr.mxu0 0.0
      %1108 = vmatpush2.msra.mxu0 0.0
      %1109 = vmatprep.subr.mxu0 0.0
      %1110 = vmatpush2.msra.mxu0 0.0
      %1111 = vmatprep.subr.mxu0 0.0
      %1112 = vmatpush2.msra.mxu0 0.0
      %1113 = vmatprep.mubr.f32.mxu0 0.0
      %1114 = vmatmul.mubr.f32.gmra.mxu0 %v1041
      %v1115 = vpop.f32.mrf.mxu0
      %v1116 = vadd.f32 0.0, %v1115
      %v1117 = vpop.f32.mrf.mxu0
      %v1118 = vadd.f32 0.0, %v1117
      %1119 = vdwg.mxu0
      %v1120 = vadd.f32 %v1025, %v1116
      %v1121 = vadd.f32 %v1026, %v1118
      %1123 = vset.pattern.permute.xlu0 0
      %1124 = vperm.xlu0 %1123, %v273
      %v1125 = vpop.permute.xlu0 %1124
      %v1127 = vadd.f32 %v1120, %v1125
      %v1128 = vadd.f32 %v1121, %v1125
      %v1129 = vmax.f32 %v1127, 0.0
      %v1130 = vmax.f32 %v1128, 0.0
      %1133 = vrot.lane.b32.xlu0 %v1129, 17
      %v1134 = vpop.permute.xlu0 %1133
      %1135 = vrot.lane.b32.xlu0 %v1130, 17
      %v1136 = vpop.permute.xlu0 %1135
      %v1137 = vsel %vm281, %v1134, %v1136
      %v1141 = vsel %vm281, 0.0, %v1134
      %v1142 = vsel %vm281, %v1136, 0.0
      %v1143 = vsel %vm290, %v1141, 0.0
      %v1144 = vsel %vm291, %v1137, 0.0
      %1147 = vrot.lane.b32.xlu0 %v1141, 127
      %v1148 = vpop.permute.xlu0 %1147
      %1149 = vrot.lane.b32.xlu0 %v1137, 127
      %v1150 = vpop.permute.xlu0 %1149
      %1151 = vrot.lane.b32.xlu0 %v1142, 127
      %v1152 = vpop.permute.xlu0 %1151
      %v1153 = vsel %vm302, %v1148, %v1150
      %v1154 = vsel %vm302, %v1150, %v1152
      %v1156 = vsel %vm305, %v265, 0
      %v1158 = vsel %vm309, %v1153, 0
      %v1160 = vsel %vm309, %v1154, 0
      %1162 = vmatprep.subr.mxu0 0.0
      %1163 = vmatpush1.msra.mxu0 0.0
      %1164 = vmatprep.subr.mxu0 0.0
      %1165 = vmatpush1.msra.mxu0 0.0
      %1166 = vmatprep.subr.mxu0 0.0
      %1167 = vmatpush1.msra.mxu0 0.0
      %1168 = vmatprep.subr.mxu0 0.0
      %1169 = vmatpush1.msra.mxu0 0.0
      %1170 = vmatprep.subr.mxu0 0.0
      %1171 = vmatpush1.msra.mxu0 0.0
      %1172 = vmatprep.subr.mxu0 0.0
      %1173 = vmatpush1.msra.mxu0 0.0
      %1174 = vmatprep.subr.mxu0 0.0
      %1175 = vmatpush1.msra.mxu0 0.0
      %1176 = vmatprep.subr.mxu0 0.0
      %1177 = vmatpush1.msra.mxu0 0.0
      %1178 = vmatprep.subr.mxu0 0.0
      %1179 = vmatpush1.msra.mxu0 0.0
      %1180 = vmatprep.subr.mxu0 0.0
      %1181 = vmatpush1.msra.mxu0 0.0
      %1182 = vmatprep.subr.mxu0 0.0
      %1183 = vmatpush1.msra.mxu0 0.0
      %1184 = vmatprep.subr.mxu0 0.0
      %1185 = vmatpush1.msra.mxu0 0.0
      %1186 = vmatprep.subr.mxu0 0.0
      %1187 = vmatpush1.msra.mxu0 0.0
      %1188 = vmatprep.subr.mxu0 0.0
      %1189 = vmatpush1.msra.mxu0 0.0
      %1190 = vmatprep.subr.mxu0 0.0
      %1191 = vmatpush1.msra.mxu0 0.0
      %1192 = vmatprep.subr.mxu0 %v1160
      %1193 = vmatpush1.msra.mxu0 %v1158
      %1194 = vmatprep.subr.mxu0 0.0
      %1195 = vmatpush2.msra.mxu0 0.0
      %1196 = vmatprep.subr.mxu0 0.0
      %1197 = vmatpush2.msra.mxu0 0.0
      %1198 = vmatprep.subr.mxu0 0.0
      %1199 = vmatpush2.msra.mxu0 0.0
      %1200 = vmatprep.subr.mxu0 0.0
      %1201 = vmatpush2.msra.mxu0 0.0
      %1202 = vmatprep.subr.mxu0 0.0
      %1203 = vmatpush2.msra.mxu0 0.0
      %1204 = vmatprep.subr.mxu0 0.0
      %1205 = vmatpush2.msra.mxu0 0.0
      %1206 = vmatprep.subr.mxu0 0.0
      %1207 = vmatpush2.msra.mxu0 0.0
      %1208 = vmatprep.subr.mxu0 0.0
      %1209 = vmatpush2.msra.mxu0 0.0
      %1210 = vmatprep.subr.mxu0 0.0
      %1211 = vmatpush2.msra.mxu0 0.0
      %1212 = vmatprep.subr.mxu0 0.0
      %1213 = vmatpush2.msra.mxu0 0.0
      %1214 = vmatprep.subr.mxu0 0.0
      %1215 = vmatpush2.msra.mxu0 0.0
      %1216 = vmatprep.subr.mxu0 0.0
      %1217 = vmatpush2.msra.mxu0 0.0
      %1218 = vmatprep.subr.mxu0 0.0
      %1219 = vmatpush2.msra.mxu0 0.0
      %1220 = vmatprep.subr.mxu0 0.0
      %1221 = vmatpush2.msra.mxu0 0.0
      %1222 = vmatprep.subr.mxu0 0.0
      %1223 = vmatpush2.msra.mxu0 0.0
      %1224 = vmatprep.subr.mxu0 0.0
      %1225 = vmatpush2.msra.mxu0 0.0
      %1226 = vmatprep.mubr.f32.mxu0 0.0
      %1227 = vmatmul.mubr.f32.gmra.mxu0 %v1156
      %v1228 = vpop.f32.mrf.mxu0
      %v1229 = vadd.f32 0.0, %v1228
      %v1230 = vpop.f32.mrf.mxu0
      %v1231 = vadd.f32 0.0, %v1230
      %1232 = vdwg.mxu0
      %v1234 = vsel %vm305, %v264, 0
      %v1237 = vsel %vm309, %v1143, 0
      %v1240 = vsel %vm309, %v1144, 0
      %1242 = vmatprep.subr.mxu0 0.0
      %1243 = vmatpush1.msra.mxu0 0.0
      %1244 = vmatprep.subr.mxu0 0.0
      %1245 = vmatpush1.msra.mxu0 0.0
      %1246 = vmatprep.subr.mxu0 0.0
      %1247 = vmatpush1.msra.mxu0 0.0
      %1248 = vmatprep.subr.mxu0 0.0
      %1249 = vmatpush1.msra.mxu0 0.0
      %1250 = vmatprep.subr.mxu0 0.0
      %1251 = vmatpush1.msra.mxu0 0.0
      %1252 = vmatprep.subr.mxu0 0.0
      %1253 = vmatpush1.msra.mxu0 0.0
      %1254 = vmatprep.subr.mxu0 0.0
      %1255 = vmatpush1.msra.mxu0 0.0
      %1256 = vmatprep.subr.mxu0 0.0
      %1257 = vmatpush1.msra.mxu0 0.0
      %1258 = vmatprep.subr.mxu0 0.0
      %1259 = vmatpush1.msra.mxu0 0.0
      %1260 = vmatprep.subr.mxu0 0.0
      %1261 = vmatpush1.msra.mxu0 0.0
      %1262 = vmatprep.subr.mxu0 0.0
      %1263 = vmatpush1.msra.mxu0 0.0
      %1264 = vmatprep.subr.mxu0 0.0
      %1265 = vmatpush1.msra.mxu0 0.0
      %1266 = vmatprep.subr.mxu0 0.0
      %1267 = vmatpush1.msra.mxu0 0.0
      %1268 = vmatprep.subr.mxu0 0.0
      %1269 = vmatpush1.msra.mxu0 0.0
      %1270 = vmatprep.subr.mxu0 0.0
      %1271 = vmatpush1.msra.mxu0 0.0
      %1272 = vmatprep.subr.mxu0 %v1240
      %1273 = vmatpush1.msra.mxu0 %v1237
      %1274 = vmatprep.subr.mxu0 0.0
      %1275 = vmatpush2.msra.mxu0 0.0
      %1276 = vmatprep.subr.mxu0 0.0
      %1277 = vmatpush2.msra.mxu0 0.0
      %1278 = vmatprep.subr.mxu0 0.0
      %1279 = vmatpush2.msra.mxu0 0.0
      %1280 = vmatprep.subr.mxu0 0.0
      %1281 = vmatpush2.msra.mxu0 0.0
      %1282 = vmatprep.subr.mxu0 0.0
      %1283 = vmatpush2.msra.mxu0 0.0
      %1284 = vmatprep.subr.mxu0 0.0
      %1285 = vmatpush2.msra.mxu0 0.0
      %1286 = vmatprep.subr.mxu0 0.0
      %1287 = vmatpush2.msra.mxu0 0.0
      %1288 = vmatprep.subr.mxu0 0.0
      %1289 = vmatpush2.msra.mxu0 0.0
      %1290 = vmatprep.subr.mxu0 0.0
      %1291 = vmatpush2.msra.mxu0 0.0
      %1292 = vmatprep.subr.mxu0 0.0
      %1293 = vmatpush2.msra.mxu0 0.0
      %1294 = vmatprep.subr.mxu0 0.0
      %1295 = vmatpush2.msra.mxu0 0.0
      %1296 = vmatprep.subr.mxu0 0.0
      %1297 = vmatpush2.msra.mxu0 0.0
      %1298 = vmatprep.subr.mxu0 0.0
      %1299 = vmatpush2.msra.mxu0 0.0
      %1300 = vmatprep.subr.mxu0 0.0
      %1301 = vmatpush2.msra.mxu0 0.0
      %1302 = vmatprep.subr.mxu0 0.0
      %1303 = vmatpush2.msra.mxu0 0.0
      %1304 = vmatprep.subr.mxu0 0.0
      %1305 = vmatpush2.msra.mxu0 0.0
      %1306 = vmatprep.mubr.f32.mxu0 0.0
      %1307 = vmatmul.mubr.f32.gmra.mxu0 %v1234
      %v1308 = vpop.f32.mrf.mxu0
      %v1309 = vadd.f32 %v1229, %v1308
      %v1310 = vpop.f32.mrf.mxu0
      %v1311 = vadd.f32 %v1231, %v1310
      %1312 = vdwg.mxu0
      %1313 = vrot.lane.b32.xlu0 %v1141, 126
      %v1314 = vpop.permute.xlu0 %1313
      %1315 = vrot.lane.b32.xlu0 %v1137, 126
      %v1316 = vpop.permute.xlu0 %1315
      %1317 = vrot.lane.b32.xlu0 %v1142, 126
      %v1318 = vpop.permute.xlu0 %1317
      %v1319 = vsel %vm475, %v1314, %v1316
      %v1320 = vsel %vm475, %v1316, %v1318
      %v1323 = vsel %vm467, %v1319, 0.0
      %v1324 = vsel %vm468, %v1320, 0.0
      %v1326 = vsel %vm305, %v266, 0
      %v1329 = vsel %vm309, %v1323, 0
      %v1332 = vsel %vm309, %v1324, 0
      %1334 = vmatprep.subr.mxu0 0.0
      %1335 = vmatpush1.msra.mxu0 0.0
      %1336 = vmatprep.subr.mxu0 0.0
      %1337 = vmatpush1.msra.mxu0 0.0
      %1338 = vmatprep.subr.mxu0 0.0
      %1339 = vmatpush1.msra.mxu0 0.0
      %1340 = vmatprep.subr.mxu0 0.0
      %1341 = vmatpush1.msra.mxu0 0.0
      %1342 = vmatprep.subr.mxu0 0.0
      %1343 = vmatpush1.msra.mxu0 0.0
      %1344 = vmatprep.subr.mxu0 0.0
      %1345 = vmatpush1.msra.mxu0 0.0
      %1346 = vmatprep.subr.mxu0 0.0
      %1347 = vmatpush1.msra.mxu0 0.0
      %1348 = vmatprep.subr.mxu0 0.0
      %1349 = vmatpush1.msra.mxu0 0.0
      %1350 = vmatprep.subr.mxu0 0.0
      %1351 = vmatpush1.msra.mxu0 0.0
      %1352 = vmatprep.subr.mxu0 0.0
      %1353 = vmatpush1.msra.mxu0 0.0
      %1354 = vmatprep.subr.mxu0 0.0
      %1355 = vmatpush1.msra.mxu0 0.0
      %1356 = vmatprep.subr.mxu0 0.0
      %1357 = vmatpush1.msra.mxu0 0.0
      %1358 = vmatprep.subr.mxu0 0.0
      %1359 = vmatpush1.msra.mxu0 0.0
      %1360 = vmatprep.subr.mxu0 0.0
      %1361 = vmatpush1.msra.mxu0 0.0
      %1362 = vmatprep.subr.mxu0 0.0
      %1363 = vmatpush1.msra.mxu0 0.0
      %1364 = vmatprep.subr.mxu0 %v1332
      %1365 = vmatpush1.msra.mxu0 %v1329
      %1366 = vmatprep.subr.mxu0 0.0
      %1367 = vmatpush2.msra.mxu0 0.0
      %1368 = vmatprep.subr.mxu0 0.0
      %1369 = vmatpush2.msra.mxu0 0.0
      %1370 = vmatprep.subr.mxu0 0.0
      %1371 = vmatpush2.msra.mxu0 0.0
      %1372 = vmatprep.subr.mxu0 0.0
      %1373 = vmatpush2.msra.mxu0 0.0
      %1374 = vmatprep.subr.mxu0 0.0
      %1375 = vmatpush2.msra.mxu0 0.0
      %1376 = vmatprep.subr.mxu0 0.0
      %1377 = vmatpush2.msra.mxu0 0.0
      %1378 = vmatprep.subr.mxu0 0.0
      %1379 = vmatpush2.msra.mxu0 0.0
      %1380 = vmatprep.subr.mxu0 0.0
      %1381 = vmatpush2.msra.mxu0 0.0
      %1382 = vmatprep.subr.mxu0 0.0
      %1383 = vmatpush2.msra.mxu0 0.0
      %1384 = vmatprep.subr.mxu0 0.0
      %1385 = vmatpush2.msra.mxu0 0.0
      %1386 = vmatprep.subr.mxu0 0.0
      %1387 = vmatpush2.msra.mxu0 0.0
      %1388 = vmatprep.subr.mxu0 0.0
      %1389 = vmatpush2.msra.mxu0 0.0
      %1390 = vmatprep.subr.mxu0 0.0
      %1391 = vmatpush2.msra.mxu0 0.0
      %1392 = vmatprep.subr.mxu0 0.0
      %1393 = vmatpush2.msra.mxu0 0.0
      %1394 = vmatprep.subr.mxu0 0.0
      %1395 = vmatpush2.msra.mxu0 0.0
      %1396 = vmatprep.subr.mxu0 0.0
      %1397 = vmatpush2.msra.mxu0 0.0
      %1398 = vmatprep.mubr.f32.mxu0 0.0
      %1399 = vmatmul.mubr.f32.gmra.mxu0 %v1326
      %v1400 = vpop.f32.mrf.mxu0
      %v1401 = vadd.f32 0.0, %v1400
      %v1402 = vpop.f32.mrf.mxu0
      %v1403 = vadd.f32 0.0, %v1402
      %1404 = vdwg.mxu0
      %v1405 = vadd.f32 %v1309, %v1401
      %v1406 = vadd.f32 %v1311, %v1403
      %1407 = vrot.lane.b32.xlu0 %v1141, 112
      %v1408 = vpop.permute.xlu0 %1407
      %1409 = vrot.lane.b32.xlu0 %v1137, 112
      %v1410 = vpop.permute.xlu0 %1409
      %1411 = vrot.lane.b32.xlu0 %v1142, 112
      %v1412 = vpop.permute.xlu0 %1411
      %v1413 = vsel %vm570, %v1408, %v1410
      %v1414 = vsel %vm570, %v1410, %v1412
      %v1417 = vsel %vm290, %v1413, 0.0
      %v1418 = vsel %vm291, %v1414, 0.0
      %v1420 = vsel %vm305, %v267, 0
      %v1423 = vsel %vm309, %v1417, 0
      %v1426 = vsel %vm309, %v1418, 0
      %1428 = vmatprep.subr.mxu0 0.0
      %1429 = vmatpush1.msra.mxu0 0.0
      %1430 = vmatprep.subr.mxu0 0.0
      %1431 = vmatpush1.msra.mxu0 0.0
      %1432 = vmatprep.subr.mxu0 0.0
      %1433 = vmatpush1.msra.mxu0 0.0
      %1434 = vmatprep.subr.mxu0 0.0
      %1435 = vmatpush1.msra.mxu0 0.0
      %1436 = vmatprep.subr.mxu0 0.0
      %1437 = vmatpush1.msra.mxu0 0.0
      %1438 = vmatprep.subr.mxu0 0.0
      %1439 = vmatpush1.msra.mxu0 0.0
      %1440 = vmatprep.subr.mxu0 0.0
      %1441 = vmatpush1.msra.mxu0 0.0
      %1442 = vmatprep.subr.mxu0 0.0
      %1443 = vmatpush1.msra.mxu0 0.0
      %1444 = vmatprep.subr.mxu0 0.0
      %1445 = vmatpush1.msra.mxu0 0.0
      %1446 = vmatprep.subr.mxu0 0.0
      %1447 = vmatpush1.msra.mxu0 0.0
      %1448 = vmatprep.subr.mxu0 0.0
      %1449 = vmatpush1.msra.mxu0 0.0
      %1450 = vmatprep.subr.mxu0 0.0
      %1451 = vmatpush1.msra.mxu0 0.0
      %1452 = vmatprep.subr.mxu0 0.0
      %1453 = vmatpush1.msra.mxu0 0.0
      %1454 = vmatprep.subr.mxu0 0.0
      %1455 = vmatpush1.msra.mxu0 0.0
      %1456 = vmatprep.subr.mxu0 0.0
      %1457 = vmatpush1.msra.mxu0 0.0
      %1458 = vmatprep.subr.mxu0 %v1426
      %1459 = vmatpush1.msra.mxu0 %v1423
      %1460 = vmatprep.subr.mxu0 0.0
      %1461 = vmatpush2.msra.mxu0 0.0
      %1462 = vmatprep.subr.mxu0 0.0
      %1463 = vmatpush2.msra.mxu0 0.0
      %1464 = vmatprep.subr.mxu0 0.0
      %1465 = vmatpush2.msra.mxu0 0.0
      %1466 = vmatprep.subr.mxu0 0.0
      %1467 = vmatpush2.msra.mxu0 0.0
      %1468 = vmatprep.subr.mxu0 0.0
      %1469 = vmatpush2.msra.mxu0 0.0
      %1470 = vmatprep.subr.mxu0 0.0
      %1471 = vmatpush2.msra.mxu0 0.0
      %1472 = vmatprep.subr.mxu0 0.0
      %1473 = vmatpush2.msra.mxu0 0.0
      %1474 = vmatprep.subr.mxu0 0.0
      %1475 = vmatpush2.msra.mxu0 0.0
      %1476 = vmatprep.subr.mxu0 0.0
      %1477 = vmatpush2.msra.mxu0 0.0
      %1478 = vmatprep.subr.mxu0 0.0
      %1479 = vmatpush2.msra.mxu0 0.0
      %1480 = vmatprep.subr.mxu0 0.0
      %1481 = vmatpush2.msra.mxu0 0.0
      %1482 = vmatprep.subr.mxu0 0.0
      %1483 = vmatpush2.msra.mxu0 0.0
      %1484 = vmatprep.subr.mxu0 0.0
      %1485 = vmatpush2.msra.mxu0 0.0
      %1486 = vmatprep.subr.mxu0 0.0
      %1487 = vmatpush2.msra.mxu0 0.0
      %1488 = vmatprep.subr.mxu0 0.0
      %1489 = vmatpush2.msra.mxu0 0.0
      %1490 = vmatprep.subr.mxu0 0.0
      %1491 = vmatpush2.msra.mxu0 0.0
      %1492 = vmatprep.mubr.f32.mxu0 0.0
      %1493 = vmatmul.mubr.f32.gmra.mxu0 %v1420
      %v1494 = vpop.f32.mrf.mxu0
      %v1495 = vadd.f32 0.0, %v1494
      %v1496 = vpop.f32.mrf.mxu0
      %v1497 = vadd.f32 0.0, %v1496
      %1498 = vdwg.mxu0
      %v1499 = vadd.f32 %v1405, %v1495
      %v1500 = vadd.f32 %v1406, %v1497
      %1501 = vrot.lane.b32.xlu0 %v1141, 111
      %v1502 = vpop.permute.xlu0 %1501
      %1503 = vrot.lane.b32.xlu0 %v1137, 111
      %v1504 = vpop.permute.xlu0 %1503
      %1505 = vrot.lane.b32.xlu0 %v1142, 111
      %v1506 = vpop.permute.xlu0 %1505
      %v1507 = vsel %vm665, %v1502, %v1504
      %v1508 = vsel %vm665, %v1504, %v1506
      %v1510 = vsel %vm305, %v268, 0
      %v1512 = vsel %vm309, %v1507, 0
      %v1514 = vsel %vm309, %v1508, 0
      %1516 = vmatprep.subr.mxu0 0.0
      %1517 = vmatpush1.msra.mxu0 0.0
      %1518 = vmatprep.subr.mxu0 0.0
      %1519 = vmatpush1.msra.mxu0 0.0
      %1520 = vmatprep.subr.mxu0 0.0
      %1521 = vmatpush1.msra.mxu0 0.0
      %1522 = vmatprep.subr.mxu0 0.0
      %1523 = vmatpush1.msra.mxu0 0.0
      %1524 = vmatprep.subr.mxu0 0.0
      %1525 = vmatpush1.msra.mxu0 0.0
      %1526 = vmatprep.subr.mxu0 0.0
      %1527 = vmatpush1.msra.mxu0 0.0
      %1528 = vmatprep.subr.mxu0 0.0
      %1529 = vmatpush1.msra.mxu0 0.0
      %1530 = vmatprep.subr.mxu0 0.0
      %1531 = vmatpush1.msra.mxu0 0.0
      %1532 = vmatprep.subr.mxu0 0.0
      %1533 = vmatpush1.msra.mxu0 0.0
      %1534 = vmatprep.subr.mxu0 0.0
      %1535 = vmatpush1.msra.mxu0 0.0
      %1536 = vmatprep.subr.mxu0 0.0
      %1537 = vmatpush1.msra.mxu0 0.0
      %1538 = vmatprep.subr.mxu0 0.0
      %1539 = vmatpush1.msra.mxu0 0.0
      %1540 = vmatprep.subr.mxu0 0.0
      %1541 = vmatpush1.msra.mxu0 0.0
      %1542 = vmatprep.subr.mxu0 0.0
      %1543 = vmatpush1.msra.mxu0 0.0
      %1544 = vmatprep.subr.mxu0 0.0
      %1545 = vmatpush1.msra.mxu0 0.0
      %1546 = vmatprep.subr.mxu0 %v1514
      %1547 = vmatpush1.msra.mxu0 %v1512
      %1548 = vmatprep.subr.mxu0 0.0
      %1549 = vmatpush2.msra.mxu0 0.0
      %1550 = vmatprep.subr.mxu0 0.0
      %1551 = vmatpush2.msra.mxu0 0.0
      %1552 = vmatprep.subr.mxu0 0.0
      %1553 = vmatpush2.msra.mxu0 0.0
      %1554 = vmatprep.subr.mxu0 0.0
      %1555 = vmatpush2.msra.mxu0 0.0
      %1556 = vmatprep.subr.mxu0 0.0
      %1557 = vmatpush2.msra.mxu0 0.0
      %1558 = vmatprep.subr.mxu0 0.0
      %1559 = vmatpush2.msra.mxu0 0.0
      %1560 = vmatprep.subr.mxu0 0.0
      %1561 = vmatpush2.msra.mxu0 0.0
      %1562 = vmatprep.subr.mxu0 0.0
      %1563 = vmatpush2.msra.mxu0 0.0
      %1564 = vmatprep.subr.mxu0 0.0
      %1565 = vmatpush2.msra.mxu0 0.0
      %1566 = vmatprep.subr.mxu0 0.0
      %1567 = vmatpush2.msra.mxu0 0.0
      %1568 = vmatprep.subr.mxu0 0.0
      %1569 = vmatpush2.msra.mxu0 0.0
      %1570 = vmatprep.subr.mxu0 0.0
      %1571 = vmatpush2.msra.mxu0 0.0
      %1572 = vmatprep.subr.mxu0 0.0
      %1573 = vmatpush2.msra.mxu0 0.0
      %1574 = vmatprep.subr.mxu0 0.0
      %1575 = vmatpush2.msra.mxu0 0.0
      %1576 = vmatprep.subr.mxu0 0.0
      %1577 = vmatpush2.msra.mxu0 0.0
      %1578 = vmatprep.subr.mxu0 0.0
      %1579 = vmatpush2.msra.mxu0 0.0
      %1580 = vmatprep.mubr.f32.mxu0 0.0
      %1581 = vmatmul.mubr.f32.gmra.mxu0 %v1510
      %v1582 = vpop.f32.mrf.mxu0
      %v1583 = vadd.f32 0.0, %v1582
      %v1584 = vpop.f32.mrf.mxu0
      %v1585 = vadd.f32 0.0, %v1584
      %1586 = vdwg.mxu0
      %v1587 = vadd.f32 %v1499, %v1583
      %v1588 = vadd.f32 %v1500, %v1585
      %1589 = vrot.lane.b32.xlu0 %v1141, 110
      %v1590 = vpop.permute.xlu0 %1589
      %1591 = vrot.lane.b32.xlu0 %v1137, 110
      %v1592 = vpop.permute.xlu0 %1591
      %1593 = vrot.lane.b32.xlu0 %v1142, 110
      %v1594 = vpop.permute.xlu0 %1593
      %v1595 = vsel %vm754, %v1590, %v1592
      %v1596 = vsel %vm754, %v1592, %v1594
      %v1599 = vsel %vm467, %v1595, 0.0
      %v1600 = vsel %vm468, %v1596, 0.0
      %v1602 = vsel %vm305, %v269, 0
      %v1605 = vsel %vm309, %v1599, 0
      %v1608 = vsel %vm309, %v1600, 0
      %1610 = vmatprep.subr.mxu0 0.0
      %1611 = vmatpush1.msra.mxu0 0.0
      %1612 = vmatprep.subr.mxu0 0.0
      %1613 = vmatpush1.msra.mxu0 0.0
      %1614 = vmatprep.subr.mxu0 0.0
      %1615 = vmatpush1.msra.mxu0 0.0
      %1616 = vmatprep.subr.mxu0 0.0
      %1617 = vmatpush1.msra.mxu0 0.0
      %1618 = vmatprep.subr.mxu0 0.0
      %1619 = vmatpush1.msra.mxu0 0.0
      %1620 = vmatprep.subr.mxu0 0.0
      %1621 = vmatpush1.msra.mxu0 0.0
      %1622 = vmatprep.subr.mxu0 0.0
      %1623 = vmatpush1.msra.mxu0 0.0
      %1624 = vmatprep.subr.mxu0 0.0
      %1625 = vmatpush1.msra.mxu0 0.0
      %1626 = vmatprep.subr.mxu0 0.0
      %1627 = vmatpush1.msra.mxu0 0.0
      %1628 = vmatprep.subr.mxu0 0.0
      %1629 = vmatpush1.msra.mxu0 0.0
      %1630 = vmatprep.subr.mxu0 0.0
      %1631 = vmatpush1.msra.mxu0 0.0
      %1632 = vmatprep.subr.mxu0 0.0
      %1633 = vmatpush1.msra.mxu0 0.0
      %1634 = vmatprep.subr.mxu0 0.0
      %1635 = vmatpush1.msra.mxu0 0.0
      %1636 = vmatprep.subr.mxu0 0.0
      %1637 = vmatpush1.msra.mxu0 0.0
      %1638 = vmatprep.subr.mxu0 0.0
      %1639 = vmatpush1.msra.mxu0 0.0
      %1640 = vmatprep.subr.mxu0 %v1608
      %1641 = vmatpush1.msra.mxu0 %v1605
      %1642 = vmatprep.subr.mxu0 0.0
      %1643 = vmatpush2.msra.mxu0 0.0
      %1644 = vmatprep.subr.mxu0 0.0
      %1645 = vmatpush2.msra.mxu0 0.0
      %1646 = vmatprep.subr.mxu0 0.0
      %1647 = vmatpush2.msra.mxu0 0.0
      %1648 = vmatprep.subr.mxu0 0.0
      %1649 = vmatpush2.msra.mxu0 0.0
      %1650 = vmatprep.subr.mxu0 0.0
      %1651 = vmatpush2.msra.mxu0 0.0
      %1652 = vmatprep.subr.mxu0 0.0
      %1653 = vmatpush2.msra.mxu0 0.0
      %1654 = vmatprep.subr.mxu0 0.0
      %1655 = vmatpush2.msra.mxu0 0.0
      %1656 = vmatprep.subr.mxu0 0.0
      %1657 = vmatpush2.msra.mxu0 0.0
      %1658 = vmatprep.subr.mxu0 0.0
      %1659 = vmatpush2.msra.mxu0 0.0
      %1660 = vmatprep.subr.mxu0 0.0
      %1661 = vmatpush2.msra.mxu0 0.0
      %1662 = vmatprep.subr.mxu0 0.0
      %1663 = vmatpush2.msra.mxu0 0.0
      %1664 = vmatprep.subr.mxu0 0.0
      %1665 = vmatpush2.msra.mxu0 0.0
      %1666 = vmatprep.subr.mxu0 0.0
      %1667 = vmatpush2.msra.mxu0 0.0
      %1668 = vmatprep.subr.mxu0 0.0
      %1669 = vmatpush2.msra.mxu0 0.0
      %1670 = vmatprep.subr.mxu0 0.0
      %1671 = vmatpush2.msra.mxu0 0.0
      %1672 = vmatprep.subr.mxu0 0.0
      %1673 = vmatpush2.msra.mxu0 0.0
      %1674 = vmatprep.mubr.f32.mxu0 0.0
      %1675 = vmatmul.mubr.f32.gmra.mxu0 %v1602
      %v1676 = vpop.f32.mrf.mxu0
      %v1677 = vadd.f32 0.0, %v1676
      %v1678 = vpop.f32.mrf.mxu0
      %v1679 = vadd.f32 0.0, %v1678
      %1680 = vdwg.mxu0
      %v1681 = vadd.f32 %v1587, %v1677
      %v1682 = vadd.f32 %v1588, %v1679
      %1683 = vrot.lane.b32.xlu0 %v1141, 96
      %v1684 = vpop.permute.xlu0 %1683
      %1685 = vrot.lane.b32.xlu0 %v1137, 96
      %v1686 = vpop.permute.xlu0 %1685
      %1687 = vrot.lane.b32.xlu0 %v1142, 96
      %v1688 = vpop.permute.xlu0 %1687
      %v1689 = vsel %vm849, %v1684, %v1686
      %v1690 = vsel %vm849, %v1686, %v1688
      %v1693 = vsel %vm290, %v1689, 0.0
      %v1694 = vsel %vm291, %v1690, 0.0
      %v1696 = vsel %vm305, %v270, 0
      %v1699 = vsel %vm309, %v1693, 0
      %v1702 = vsel %vm309, %v1694, 0
      %1704 = vmatprep.subr.mxu0 0.0
      %1705 = vmatpush1.msra.mxu0 0.0
      %1706 = vmatprep.subr.mxu0 0.0
      %1707 = vmatpush1.msra.mxu0 0.0
      %1708 = vmatprep.subr.mxu0 0.0
      %1709 = vmatpush1.msra.mxu0 0.0
      %1710 = vmatprep.subr.mxu0 0.0
      %1711 = vmatpush1.msra.mxu0 0.0
      %1712 = vmatprep.subr.mxu0 0.0
      %1713 = vmatpush1.msra.mxu0 0.0
      %1714 = vmatprep.subr.mxu0 0.0
      %1715 = vmatpush1.msra.mxu0 0.0
      %1716 = vmatprep.subr.mxu0 0.0
      %1717 = vmatpush1.msra.mxu0 0.0
      %1718 = vmatprep.subr.mxu0 0.0
      %1719 = vmatpush1.msra.mxu0 0.0
      %1720 = vmatprep.subr.mxu0 0.0
      %1721 = vmatpush1.msra.mxu0 0.0
      %1722 = vmatprep.subr.mxu0 0.0
      %1723 = vmatpush1.msra.mxu0 0.0
      %1724 = vmatprep.subr.mxu0 0.0
      %1725 = vmatpush1.msra.mxu0 0.0
      %1726 = vmatprep.subr.mxu0 0.0
      %1727 = vmatpush1.msra.mxu0 0.0
      %1728 = vmatprep.subr.mxu0 0.0
      %1729 = vmatpush1.msra.mxu0 0.0
      %1730 = vmatprep.subr.mxu0 0.0
      %1731 = vmatpush1.msra.mxu0 0.0
      %1732 = vmatprep.subr.mxu0 0.0
      %1733 = vmatpush1.msra.mxu0 0.0
      %1734 = vmatprep.subr.mxu0 %v1702
      %1735 = vmatpush1.msra.mxu0 %v1699
      %1736 = vmatprep.subr.mxu0 0.0
      %1737 = vmatpush2.msra.mxu0 0.0
      %1738 = vmatprep.subr.mxu0 0.0
      %1739 = vmatpush2.msra.mxu0 0.0
      %1740 = vmatprep.subr.mxu0 0.0
      %1741 = vmatpush2.msra.mxu0 0.0
      %1742 = vmatprep.subr.mxu0 0.0
      %1743 = vmatpush2.msra.mxu0 0.0
      %1744 = vmatprep.subr.mxu0 0.0
      %1745 = vmatpush2.msra.mxu0 0.0
      %1746 = vmatprep.subr.mxu0 0.0
      %1747 = vmatpush2.msra.mxu0 0.0
      %1748 = vmatprep.subr.mxu0 0.0
      %1749 = vmatpush2.msra.mxu0 0.0
      %1750 = vmatprep.subr.mxu0 0.0
      %1751 = vmatpush2.msra.mxu0 0.0
      %1752 = vmatprep.subr.mxu0 0.0
      %1753 = vmatpush2.msra.mxu0 0.0
      %1754 = vmatprep.subr.mxu0 0.0
      %1755 = vmatpush2.msra.mxu0 0.0
      %1756 = vmatprep.subr.mxu0 0.0
      %1757 = vmatpush2.msra.mxu0 0.0
      %1758 = vmatprep.subr.mxu0 0.0
      %1759 = vmatpush2.msra.mxu0 0.0
      %1760 = vmatprep.subr.mxu0 0.0
      %1761 = vmatpush2.msra.mxu0 0.0
      %1762 = vmatprep.subr.mxu0 0.0
      %1763 = vmatpush2.msra.mxu0 0.0
      %1764 = vmatprep.subr.mxu0 0.0
      %1765 = vmatpush2.msra.mxu0 0.0
      %1766 = vmatprep.subr.mxu0 0.0
      %1767 = vmatpush2.msra.mxu0 0.0
      %1768 = vmatprep.mubr.f32.mxu0 0.0
      %1769 = vmatmul.mubr.f32.gmra.mxu0 %v1696
      %v1770 = vpop.f32.mrf.mxu0
      %v1771 = vadd.f32 0.0, %v1770
      %v1772 = vpop.f32.mrf.mxu0
      %v1773 = vadd.f32 0.0, %v1772
      %1774 = vdwg.mxu0
      %v1775 = vadd.f32 %v1681, %v1771
      %v1776 = vadd.f32 %v1682, %v1773
      %1777 = vrot.lane.b32.xlu0 %v1141, 95
      %v1778 = vpop.permute.xlu0 %1777
      %1779 = vrot.lane.b32.xlu0 %v1137, 95
      %v1780 = vpop.permute.xlu0 %1779
      %1781 = vrot.lane.b32.xlu0 %v1142, 95
      %v1782 = vpop.permute.xlu0 %1781
      %v1783 = vsel %vm944, %v1778, %v1780
      %v1784 = vsel %vm944, %v1780, %v1782
      %v1786 = vsel %vm305, %v271, 0
      %v1788 = vsel %vm309, %v1783, 0
      %v1790 = vsel %vm309, %v1784, 0
      %1792 = vmatprep.subr.mxu0 0.0
      %1793 = vmatpush1.msra.mxu0 0.0
      %1794 = vmatprep.subr.mxu0 0.0
      %1795 = vmatpush1.msra.mxu0 0.0
      %1796 = vmatprep.subr.mxu0 0.0
      %1797 = vmatpush1.msra.mxu0 0.0
      %1798 = vmatprep.subr.mxu0 0.0
      %1799 = vmatpush1.msra.mxu0 0.0
      %1800 = vmatprep.subr.mxu0 0.0
      %1801 = vmatpush1.msra.mxu0 0.0
      %1802 = vmatprep.subr.mxu0 0.0
      %1803 = vmatpush1.msra.mxu0 0.0
      %1804 = vmatprep.subr.mxu0 0.0
      %1805 = vmatpush1.msra.mxu0 0.0
      %1806 = vmatprep.subr.mxu0 0.0
      %1807 = vmatpush1.msra.mxu0 0.0
      %1808 = vmatprep.subr.mxu0 0.0
      %1809 = vmatpush1.msra.mxu0 0.0
      %1810 = vmatprep.subr.mxu0 0.0
      %1811 = vmatpush1.msra.mxu0 0.0
      %1812 = vmatprep.subr.mxu0 0.0
      %1813 = vmatpush1.msra.mxu0 0.0
      %1814 = vmatprep.subr.mxu0 0.0
      %1815 = vmatpush1.msra.mxu0 0.0
      %1816 = vmatprep.subr.mxu0 0.0
      %1817 = vmatpush1.msra.mxu0 0.0
      %1818 = vmatprep.subr.mxu0 0.0
      %1819 = vmatpush1.msra.mxu0 0.0
      %1820 = vmatprep.subr.mxu0 0.0
      %1821 = vmatpush1.msra.mxu0 0.0
      %1822 = vmatprep.subr.mxu0 %v1790
      %1823 = vmatpush1.msra.mxu0 %v1788
      %1824 = vmatprep.subr.mxu0 0.0
      %1825 = vmatpush2.msra.mxu0 0.0
      %1826 = vmatprep.subr.mxu0 0.0
      %1827 = vmatpush2.msra.mxu0 0.0
      %1828 = vmatprep.subr.mxu0 0.0
      %1829 = vmatpush2.msra.mxu0 0.0
      %1830 = vmatprep.subr.mxu0 0.0
      %1831 = vmatpush2.msra.mxu0 0.0
      %1832 = vmatprep.subr.mxu0 0.0
      %1833 = vmatpush2.msra.mxu0 0.0
      %1834 = vmatprep.subr.mxu0 0.0
      %1835 = vmatpush2.msra.mxu0 0.0
      %1836 = vmatprep.subr.mxu0 0.0
      %1837 = vmatpush2.msra.mxu0 0.0
      %1838 = vmatprep.subr.mxu0 0.0
      %1839 = vmatpush2.msra.mxu0 0.0
      %1840 = vmatprep.subr.mxu0 0.0
      %1841 = vmatpush2.msra.mxu0 0.0
      %1842 = vmatprep.subr.mxu0 0.0
      %1843 = vmatpush2.msra.mxu0 0.0
      %1844 = vmatprep.subr.mxu0 0.0
      %1845 = vmatpush2.msra.mxu0 0.0
      %1846 = vmatprep.subr.mxu0 0.0
      %1847 = vmatpush2.msra.mxu0 0.0
      %1848 = vmatprep.subr.mxu0 0.0
      %1849 = vmatpush2.msra.mxu0 0.0
      %1850 = vmatprep.subr.mxu0 0.0
      %1851 = vmatpush2.msra.mxu0 0.0
      %1852 = vmatprep.subr.mxu0 0.0
      %1853 = vmatpush2.msra.mxu0 0.0
      %1854 = vmatprep.subr.mxu0 0.0
      %1855 = vmatpush2.msra.mxu0 0.0
      %1856 = vmatprep.mubr.f32.mxu0 0.0
      %1857 = vmatmul.mubr.f32.gmra.mxu0 %v1786
      %v1858 = vpop.f32.mrf.mxu0
      %v1859 = vadd.f32 0.0, %v1858
      %v1860 = vpop.f32.mrf.mxu0
      %v1861 = vadd.f32 0.0, %v1860
      %1862 = vdwg.mxu0
      %v1863 = vadd.f32 %v1775, %v1859
      %v1864 = vadd.f32 %v1776, %v1861
      %1865 = vrot.lane.b32.xlu0 %v1141, 94
      %v1866 = vpop.permute.xlu0 %1865
      %1867 = vrot.lane.b32.xlu0 %v1137, 94
      %v1868 = vpop.permute.xlu0 %1867
      %1869 = vrot.lane.b32.xlu0 %v1142, 94
      %v1870 = vpop.permute.xlu0 %1869
      %v1871 = vsel %vm1033, %v1866, %v1868
      %v1872 = vsel %vm1033, %v1868, %v1870
      %v1875 = vsel %vm467, %v1871, 0.0
      %v1876 = vsel %vm468, %v1872, 0.0
      %v1878 = vsel %vm305, %v272, 0
      %v1881 = vsel %vm309, %v1875, 0
      %v1884 = vsel %vm309, %v1876, 0
      %1886 = vmatprep.subr.mxu0 0.0
      %1887 = vmatpush1.msra.mxu0 0.0
      %1888 = vmatprep.subr.mxu0 0.0
      %1889 = vmatpush1.msra.mxu0 0.0
      %1890 = vmatprep.subr.mxu0 0.0
      %1891 = vmatpush1.msra.mxu0 0.0
      %1892 = vmatprep.subr.mxu0 0.0
      %1893 = vmatpush1.msra.mxu0 0.0
      %1894 = vmatprep.subr.mxu0 0.0
      %1895 = vmatpush1.msra.mxu0 0.0
      %1896 = vmatprep.subr.mxu0 0.0
      %1897 = vmatpush1.msra.mxu0 0.0
      %1898 = vmatprep.subr.mxu0 0.0
      %1899 = vmatpush1.msra.mxu0 0.0
      %1900 = vmatprep.subr.mxu0 0.0
      %1901 = vmatpush1.msra.mxu0 0.0
      %1902 = vmatprep.subr.mxu0 0.0
      %1903 = vmatpush1.msra.mxu0 0.0
      %1904 = vmatprep.subr.mxu0 0.0
      %1905 = vmatpush1.msra.mxu0 0.0
      %1906 = vmatprep.subr.mxu0 0.0
      %1907 = vmatpush1.msra.mxu0 0.0
      %1908 = vmatprep.subr.mxu0 0.0
      %1909 = vmatpush1.msra.mxu0 0.0
      %1910 = vmatprep.subr.mxu0 0.0
      %1911 = vmatpush1.msra.mxu0 0.0
      %1912 = vmatprep.subr.mxu0 0.0
      %1913 = vmatpush1.msra.mxu0 0.0
      %1914 = vmatprep.subr.mxu0 0.0
      %1915 = vmatpush1.msra.mxu0 0.0
      %1916 = vmatprep.subr.mxu0 %v1884
      %1917 = vmatpush1.msra.mxu0 %v1881
      %1918 = vmatprep.subr.mxu0 0.0
      %1919 = vmatpush2.msra.mxu0 0.0
      %1920 = vmatprep.subr.mxu0 0.0
      %1921 = vmatpush2.msra.mxu0 0.0
      %1922 = vmatprep.subr.mxu0 0.0
      %1923 = vmatpush2.msra.mxu0 0.0
      %1924 = vmatprep.subr.mxu0 0.0
      %1925 = vmatpush2.msra.mxu0 0.0
      %1926 = vmatprep.subr.mxu0 0.0
      %1927 = vmatpush2.msra.mxu0 0.0
      %1928 = vmatprep.subr.mxu0 0.0
      %1929 = vmatpush2.msra.mxu0 0.0
      %1930 = vmatprep.subr.mxu0 0.0
      %1931 = vmatpush2.msra.mxu0 0.0
      %1932 = vmatprep.subr.mxu0 0.0
      %1933 = vmatpush2.msra.mxu0 0.0
      %1934 = vmatprep.subr.mxu0 0.0
      %1935 = vmatpush2.msra.mxu0 0.0
      %1936 = vmatprep.subr.mxu0 0.0
      %1937 = vmatpush2.msra.mxu0 0.0
      %1938 = vmatprep.subr.mxu0 0.0
      %1939 = vmatpush2.msra.mxu0 0.0
      %1940 = vmatprep.subr.mxu0 0.0
      %1941 = vmatpush2.msra.mxu0 0.0
      %1942 = vmatprep.subr.mxu0 0.0
      %1943 = vmatpush2.msra.mxu0 0.0
      %1944 = vmatprep.subr.mxu0 0.0
      %1945 = vmatpush2.msra.mxu0 0.0
      %1946 = vmatprep.subr.mxu0 0.0
      %1947 = vmatpush2.msra.mxu0 0.0
      %1948 = vmatprep.subr.mxu0 0.0
      %1949 = vmatpush2.msra.mxu0 0.0
      %1950 = vmatprep.mubr.f32.mxu0 0.0
      %1951 = vmatmul.mubr.f32.gmra.mxu0 %v1878
      %v1952 = vpop.f32.mrf.mxu0
      %v1953 = vadd.f32 0.0, %v1952
      %v1954 = vpop.f32.mrf.mxu0
      %v1955 = vadd.f32 0.0, %v1954
      %1956 = vdwg.mxu0
      %v1957 = vadd.f32 %v1863, %v1953
      %v1958 = vadd.f32 %v1864, %v1955
      %1960 = vset.pattern.permute.xlu0 0
      %1961 = vperm.xlu0 %1960, %v274
      %v1962 = vpop.permute.xlu0 %1961
      %v1964 = vadd.f32 %v1957, %v1962
      %v1965 = vadd.f32 %v1958, %v1962
      %v1967 = vadd.f32 %v1964, %v223
      %v1968 = vadd.f32 %v1965, %v276
      %v1969 = vmax.f32 %v1967, 0.0
      %v1970 = vmax.f32 %v1968, 0.0
      %v1973 = vcombine.low %v1969, %v1970
      %v1976 = vunpack.c.l.s4 1935823168
      %v1977 = vunpack.c.0.s8 %v1976
      %v1978 = vlaneseq
      %v1979 = vshrl.u32 %v1978, 7
      %v1980 = vsub.s32 %v1977, %v1979
      %v1981 = vrot.slane %v1973, %v1980
      %1982 = vst [vmem:[%s222] sm:$0xff] %v1981
      %p1983 = scmp.lt.s32.totalorder %s16, 1
      %s1984 = scalar_select %p1983, %s16, 1
      %s1985 = smul.addr %s1984, 8
      %s1986 = scalar_lea.vmem %s5, %s1985
      // Predicated region
      $region41: #{residual_block_forward.1} parent=39 // pred_check
        %p1987 = pneg %p144
      $region42: #{residual_block_forward.1} parent=39 // pred_check_branch
        %1989 = sbr.rel (%p1987) target = $region44
      $region43: #{residual_block_forward.1} parent=39 // pred_region
        _
      $region44: #{residual_block_forward.1} parent=39 // pred_fallthru
        _
    $region40: #{residual_block_forward.1} parent=5 // pred_fallthru
      _
    %p1990 = scmp.le.s32.totalorder 2, %s11
    // Predicated region
    $region45: #{residual_block_forward.1} parent=5 // pred_check
      %p1991 = pneg %p1990
    $region46: #{residual_block_forward.1} parent=5 // pred_check_branch
      %1993 = sbr.rel (%p1991) target = $region48
    $region47: #{residual_block_forward.1} parent=5 // pred_region
      %s1994 = ssub.s32 %s11, 2
      // Predicated region
      $region49: #{residual_block_forward.1} parent=47 // pred_check
        %p1995 = pneg %p150
      $region50: #{residual_block_forward.1} parent=47 // pred_check_branch
        %1997 = sbr.rel (%p1995) target = $region52
      $region51: #{residual_block_forward.1} parent=47 // pred_region
        %p1998 = scmp.lt.s32.totalorder %s17, 1
        %s1999 = scalar_select %p1998, %s17, 1
        %s2000 = smul.addr %s1999, 8
        %s2001 = scalar_lea.vmem %s5, %s2000
      $region52: #{residual_block_forward.1} parent=47 // pred_fallthru
        _
    $region48: #{residual_block_forward.1} parent=5 // pred_fallthru
      _
  $region6: #{residual_block_forward.1} parent=0 // loop_footer
    %s15 = sadd.s32 1, %s11
  $region7: #{residual_block_forward.1} parent=0 // loop_footer_branch
    %10 = sbr.rel target = $region3
  $region8: #{residual_block_forward.1} parent=0 // loop_exit
    _

</llo_original>
